<compile_context>
chip_gen: v5e
topology: v5e:2x2
jax: 0.10.0
libtpu: 0.0.40
codegen_flags: <defaults>
</compile_context>

<pallas_src>
import functools

import jax
import jax.numpy as jnp
from jax import lax
from jax.experimental import pallas as pl
from jax.experimental.pallas import tpu as pltpu


# ----------------------------------------------------------------- kernel ----
def _fused_kernel(x_ref, w_ref, res_ref, gamma_ref, beta_ref, o_ref, lin_ref,
                  *, eps, tb):
    """Linear (bf16 MXU, f32 acc) + BatchNorm1d (batch stats) + residual + LeakyReLU."""
    i = pl.program_id(0)
    nb = pl.num_programs(0)

    # ---- Linear for this B tile: (TB, D) @ (D, D); weight already (in, out). ----
    lin_tile = jnp.dot(x_ref[...], w_ref[...], preferred_element_type=jnp.float32)
    row = pl.multiple_of(i * tb, tb)                     # sublane-aligned offset
    lin_ref[pl.ds(row, tb), :] = lin_tile                # park tile in resident scratch

    # ---- Last tile: whole Linear output is resident -> fused BN epilogue. ------
    @pl.when(i == nb - 1)
    def _():
        lin = lin_ref[...]                               # (B, D) f32
        inv_n = 1.0 / lin.shape[0]
        mean = jnp.sum(lin, axis=0, keepdims=True) * inv_n
        centered = lin - mean                            # two-pass (stable) variance
        var = jnp.sum(centered * centered, axis=0, keepdims=True) * inv_n
        scale = gamma_ref[...] * lax.rsqrt(var + eps)    # folded BN scale (1, D)
        y = centered * scale + beta_ref[...] + res_ref[...].astype(jnp.float32)
        o_ref[...] = jnp.where(y > 0, y, 0.2 * y).astype(o_ref.dtype)


# ---------------------------------------------------------------- helpers ----
def _pick_tb(batch):
    # Large tiles amortize the ~0.35 us/step grid overhead and keep the MXU fed
    # with >=128-row LHS tiles; never fall back to tiny (8-row) tiles.
    for c in (256, 128):
        if batch % c == 0:
            return c
    return batch  # whole batch as one tile (always a legal block size)


def _vmem_limit_bytes(need):
    try:
        phys = int(getattr(pltpu.get_tpu_info(), "vmem_capacity_bytes", 64 << 20))
    except Exception:
        phys = 64 << 20                                  # v7x per-TC floor
    cap = phys - (8 << 20)                               # leave compiler headroom
    if need > cap:
        # TODO(synk): add a streamed two-phase fallback for B*D too large to keep
        # the Linear output resident in VMEM (only needed for very large batches).
        raise ValueError(f"fused SetopResBasicBlock needs {need} B of VMEM, "
                         f"but only {cap} B are available on this generation")
    return int(min(max(2 * need, 32 << 20), cap))


# ---------------------------------------------------------------- wrapper ----
def setop_res_basic_block(x, residual, weight, bias, gamma, beta, *, eps=1e-5):
    """x, residual: (B, D).  weight: (D, D) in PyTorch (out, in) layout.
    bias/gamma/beta: (D,).  BatchNorm1d uses batch statistics (training-mode
    forward), matching the PyTorch module's forward.

    The Linear bias is not used in the computation: BN's batch-mean subtraction
    cancels any per-feature constant, so the forward output is independent of it.
    """
    B, D = x.shape
    assert weight.shape == (D, D) and residual.shape == (B, D)
    del bias  # exactly cancelled by the batch-mean subtraction
    # TODO(synk): BatchNorm1d running_mean/running_var buffer updates (training-time
    # side effect) are not produced; the forward output itself does not need them.

    TB = _pick_tb(B)
    nb = B // TB

    # One-time wrapper-side prep: bf16 MXU operands, weight to (in, out) layout.
    x_bf16 = x.astype(jnp.bfloat16)
    wT_bf16 = weight.astype(jnp.bfloat16).T
    g2 = gamma.reshape(1, D).astype(jnp.float32)
    b2 = beta.reshape(1, D).astype(jnp.float32)

    need = (2 * TB * D * 2                               # streamed x tiles (2-buf, bf16)
            + 2 * D * D * 2                              # resident bf16 weight (budget x2)
            + 2 * B * D * residual.dtype.itemsize        # resident residual
            + 2 * B * D * x.dtype.itemsize               # resident output block
            + B * D * 4                                  # f32 Linear-output scratch
            + 4 * D * 4)                                 # gamma/beta blocks

    kernel = functools.partial(_fused_kernel, eps=float(eps), tb=TB)
    return pl.pallas_call(
        kernel,
        out_shape=jax.ShapeDtypeStruct((B, D), x.dtype),
        grid=(nb,),
        in_specs=[
            pl.BlockSpec((TB, D), lambda i: (i, 0)),     # x: streamed over B
            pl.BlockSpec((D, D), lambda i: (0, 0)),      # weight: fetched once, resident
            pl.BlockSpec((B, D), lambda i: (0, 0)),      # residual: fetched once, resident
            pl.BlockSpec((1, D), lambda i: (0, 0)),      # gamma
            pl.BlockSpec((1, D), lambda i: (0, 0)),      # beta
        ],
        out_specs=pl.BlockSpec((B, D), lambda i: (0, 0)),  # resident; one lane-dense store
        scratch_shapes=[pltpu.VMEM((B, D), jnp.float32)],  # resident Linear output
        compiler_params=pltpu.CompilerParams(
            dimension_semantics=("arbitrary",),          # stats carry across B tiles
            vmem_limit_bytes=_vmem_limit_bytes(need),
        ),
    )(x_bf16, wT_bf16, residual, g2, b2)


# -------------------------------------------------------------- reference ----
def reference(x, residual, weight, bias, gamma, beta, eps=1e-5):
    # Mirrors the kernel's precision policy: bf16 MXU operands, f32 accumulation,
    # f32 BN statistics.  Includes the Linear bias (which BN cancels exactly).
    lin = jnp.dot(x.astype(jnp.bfloat16), weight.astype(jnp.bfloat16).T,
                  preferred_element_type=jnp.float32) + bias
    mean = jnp.mean(lin, axis=0, keepdims=True)
    var = jnp.mean((lin - mean) ** 2, axis=0, keepdims=True)
    out = (lin - mean) * lax.rsqrt(var + eps) * gamma + beta + residual
    return jnp.where(out > 0, out, 0.2 * out)


if __name__ == "__main__":
    # latent_dim=128, batch=512 -> TB=256, nb=2: exercises streamed x tiles,
    # resident weight/residual/output blocks and the last-step fused BN epilogue.
    B, D = 512, 128
    key = jax.random.PRNGKey(0)
    kx, kr, kw, kb, kg, kbe = jax.random.split(key, 6)

    x = jax.random.normal(kx, (B, D), jnp.float32)
    residual = jax.random.normal(kr, (B, D), jnp.float32)
    weight = jax.random.normal(kw, (D, D), jnp.float32) * (1.0 / jnp.sqrt(D))
    bias = 0.01 * jax.random.normal(kb, (D,), jnp.float32)
    gamma = 1.0 + 0.1 * jax.random.normal(kg, (D,), jnp.float32)
    beta = 0.1 * jax.random.normal(kbe, (D,), jnp.float32)

    out = jax.jit(setop_res_basic_block)(x, residual, weight, bias, gamma, beta)
    out = jax.block_until_ready(out)

    ref = reference(x, residual, weight, bias, gamma, beta)
    assert out.shape == (B, D)
    max_err = float(jnp.max(jnp.abs(out - ref)))
    assert bool(jnp.allclose(out, ref, atol=2e-3, rtol=2e-3)), \
        f"mismatch vs reference (max abs err {max_err})"
    print("KERNEL_OK")
</pallas_src>

<mosaic_0001>
module attributes {stable_mosaic.version = 11 : i64} {
  func.func @_fused_kernel(%arg0: i32, %arg1: memref<256x128xbf16, #tpu.memory_space<vmem>>, %arg2: memref<128x128xbf16, #tpu.memory_space<vmem>>, %arg3: memref<512x128xf32, #tpu.memory_space<vmem>>, %arg4: memref<1x128xf32, #tpu.memory_space<vmem>>, %arg5: memref<1x128xf32, #tpu.memory_space<vmem>>, %arg6: memref<512x128xf32, #tpu.memory_space<vmem>>, %arg7: memref<512x128xf32, #tpu.memory_space<vmem>>) attributes {dimension_semantics = [#tpu.dimension_semantics<arbitrary>], iteration_bounds = array<i64: 2>, scalar_prefetch = 0 : i64, scratch_operands = 1 : i64, tpu.core_type = #tpu.core_type<tc>, window_params = [{transform_indices = @transform_0, window_bounds = array<i64: 256, 128>}, {pipeline_mode = #tpu.pipeline_mode<synchronous>, transform_indices = @transform_1, window_bounds = array<i64: 128, 128>}, {pipeline_mode = #tpu.pipeline_mode<synchronous>, transform_indices = @transform_2, window_bounds = array<i64: 512, 128>}, {pipeline_mode = #tpu.pipeline_mode<synchronous>, transform_indices = @transform_3, window_bounds = array<i64: 1, 128>}, {pipeline_mode = #tpu.pipeline_mode<synchronous>, transform_indices = @transform_4, window_bounds = array<i64: 1, 128>}, {pipeline_mode = #tpu.pipeline_mode<synchronous>, transform_indices = @transform_5, window_bounds = array<i64: 512, 128>}]} {
    %c0 = arith.constant 0 : index
    %c0_0 = arith.constant 0 : index
    %0 = vector.load %arg1[%c0, %c0_0] : memref<256x128xbf16, #tpu.memory_space<vmem>>, vector<256x128xbf16>
    %c0_1 = arith.constant 0 : index
    %c0_2 = arith.constant 0 : index
    %1 = vector.load %arg2[%c0_1, %c0_2] : memref<128x128xbf16, #tpu.memory_space<vmem>>, vector<128x128xbf16>
    %cst = arith.constant dense<0.000000e+00> : vector<256x128xf32>
    %2 = tpu.matmul %0, %1, %cst {dimension_numbers = #tpu.dot_dimension_numbers<[1], [0], [0], [1], [0, 0, 1, 1], [], []>} : vector<256x128xbf16>, vector<128x128xbf16>, vector<256x128xf32> -> vector<256x128xf32>
    %c256_i32 = arith.constant 256 : i32
    %3 = arith.muli %arg0, %c256_i32 : i32
    %4 = tpu.assume_multiple %3, 256 : i32
    %5 = arith.index_cast %4 : i32 to index
    %c0_3 = arith.constant 0 : index
    %6 = vector.load %arg7[%5, %c0_3] : memref<512x128xf32, #tpu.memory_space<vmem>>, vector<256x128xf32>
    tpu.vector_store %arg7[%5, %c0_3], %2 {strides = array<i32>} : memref<512x128xf32, #tpu.memory_space<vmem>>, vector<256x128xf32>,
    %c1_i32 = arith.constant 1 : i32
    %7 = arith.cmpi eq, %arg0, %c1_i32 : i32
    %8 = arith.extui %7 : i1 to i32
    %c0_i32 = arith.constant 0 : i32
    %9 = arith.cmpi ne, %8, %c0_i32 : i32
    scf.if %9 {
      %c0_4 = arith.constant 0 : index
      %c0_5 = arith.constant 0 : index
      %10 = vector.load %arg7[%c0_4, %c0_5] : memref<512x128xf32, #tpu.memory_space<vmem>>, vector<512x128xf32>
      %cst_6 = arith.constant dense<0.000000e+00> : vector<128xf32>
      %11 = vector.multi_reduction <add>, %10, %cst_6 [0] : vector<512x128xf32> to vector<128xf32>
      %12 = vector.shape_cast %11 : vector<128xf32> to vector<1x128xf32>
      %cst_7 = arith.constant 0.001953125 : f32
      %13 = vector.broadcast %cst_7 : f32 to vector<1x128xf32>
      %14 = arith.mulf %12, %13 : vector<1x128xf32>
      %15 = vector.broadcast %14 : vector<1x128xf32> to vector<512x128xf32>
      %16 = arith.subf %10, %15 : vector<512x128xf32>
      %17 = arith.mulf %16, %16 : vector<512x128xf32>
      %cst_8 = arith.constant dense<0.000000e+00> : vector<128xf32>
      %18 = vector.multi_reduction <add>, %17, %cst_8 [0] : vector<512x128xf32> to vector<128xf32>
      %19 = vector.shape_cast %18 : vector<128xf32> to vector<1x128xf32>
      %cst_9 = arith.constant 0.001953125 : f32
      %20 = vector.broadcast %cst_9 : f32 to vector<1x128xf32>
      %21 = arith.mulf %19, %20 : vector<1x128xf32>
      %c0_10 = arith.constant 0 : index
      %c0_11 = arith.constant 0 : index
      %22 = vector.load %arg4[%c0_10, %c0_11] : memref<1x128xf32, #tpu.memory_space<vmem>>, vector<1x128xf32>
      %cst_12 = arith.constant 9.99999974E-6 : f32
      %23 = vector.broadcast %cst_12 : f32 to vector<1x128xf32>
      %24 = arith.addf %21, %23 : vector<1x128xf32>
      %25 = math.rsqrt %24 : vector<1x128xf32>
      %26 = arith.mulf %22, %25 : vector<1x128xf32>
      %27 = vector.broadcast %26 : vector<1x128xf32> to vector<512x128xf32>
      %28 = arith.mulf %16, %27 : vector<512x128xf32>
      %c0_13 = arith.constant 0 : index
      %c0_14 = arith.constant 0 : index
      %29 = vector.load %arg5[%c0_13, %c0_14] : memref<1x128xf32, #tpu.memory_space<vmem>>, vector<1x128xf32>
      %30 = vector.broadcast %29 : vector<1x128xf32> to vector<512x128xf32>
      %31 = arith.addf %28, %30 : vector<512x128xf32>
      %c0_15 = arith.constant 0 : index
      %c0_16 = arith.constant 0 : index
      %32 = vector.load %arg3[%c0_15, %c0_16] : memref<512x128xf32, #tpu.memory_space<vmem>>, vector<512x128xf32>
      %33 = arith.addf %31, %32 : vector<512x128xf32>
      %cst_17 = arith.constant 0.000000e+00 : f32
      %34 = vector.broadcast %cst_17 : f32 to vector<512x128xf32>
      %35 = arith.cmpf ogt, %33, %34 : vector<512x128xf32>
      %cst_18 = arith.constant 2.000000e-01 : f32
      %36 = vector.broadcast %cst_18 : f32 to vector<512x128xf32>
      %37 = arith.mulf %36, %33 : vector<512x128xf32>
      %38 = arith.select %35, %33, %37 : vector<512x128xi1>, vector<512x128xf32>
      %c0_19 = arith.constant 0 : index
      %c0_20 = arith.constant 0 : index
      %39 = vector.load %arg6[%c0_19, %c0_20] : memref<512x128xf32, #tpu.memory_space<vmem>>, vector<512x128xf32>
      tpu.vector_store %arg6[%c0_19, %c0_20], %38 {strides = array<i32>} : memref<512x128xf32, #tpu.memory_space<vmem>>, vector<512x128xf32>,
    } else {
    }
    return
  }
  func.func @transform_0(%arg0: i32) -> (i32, i32) {
    %c0_i32 = arith.constant 0 : i32
    %c0_i32_0 = arith.constant 0 : i32
    return %arg0, %c0_i32 : i32, i32
  }
  func.func @transform_1(%arg0: i32) -> (i32, i32) {
    %c0_i32 = arith.constant 0 : i32
    %c0_i32_0 = arith.constant 0 : i32
    %c0_i32_1 = arith.constant 0 : i32
    return %c0_i32, %c0_i32_0 : i32, i32
  }
  func.func @transform_2(%arg0: i32) -> (i32, i32) {
    %c0_i32 = arith.constant 0 : i32
    %c0_i32_0 = arith.constant 0 : i32
    %c0_i32_1 = arith.constant 0 : i32
    return %c0_i32, %c0_i32_0 : i32, i32
  }
  func.func @transform_3(%arg0: i32) -> (i32, i32) {
    %c0_i32 = arith.constant 0 : i32
    %c0_i32_0 = arith.constant 0 : i32
    %c0_i32_1 = arith.constant 0 : i32
    return %c0_i32, %c0_i32_0 : i32, i32
  }
  func.func @transform_4(%arg0: i32) -> (i32, i32) {
    %c0_i32 = arith.constant 0 : i32
    %c0_i32_0 = arith.constant 0 : i32
    %c0_i32_1 = arith.constant 0 : i32
    return %c0_i32, %c0_i32_0 : i32, i32
  }
  func.func @transform_5(%arg0: i32) -> (i32, i32) {
    %c0_i32 = arith.constant 0 : i32
    %c0_i32_0 = arith.constant 0 : i32
    %c0_i32_1 = arith.constant 0 : i32
    return %c0_i32, %c0_i32_0 : i32, i32
  }
}

</mosaic_0001>

<llo_original>
// kernel: setop_res_basic_block.1
$region0: #{setop_res_basic_block.1}
  #allocation0 [shape = 'u32[]', space=smem, size = 0x4, offset = 0x4, fixed_abs, tag = 'smem constant byte address 0x4 - core index']
  #allocation1 [shape = 'u32[72,128]{1,0:T(1,128)}', space=vmem, size = 0x9000, scoped, tag = 'internal scratch']
  #allocation2 [shape = 'f32[512,128]{1,0:T(8,128)}', space=vmem, size = 0x40000, scoped, tag = 'scratch operand']
  %s0 = inlined_call_operand.vmem [shape: bf16[512,128], index: 0, kind: input, shape index: {}]
  %s1 = inlined_call_operand.vmem [shape: bf16[128,128], index: 1, kind: input, shape index: {}]
  %s2 = inlined_call_operand.vmem [shape: f32[512,128], index: 2, kind: input, shape index: {}]
  %s3 = inlined_call_operand.vmem [shape: f32[1,128], index: 3, kind: input, shape index: {}]
  %s4 = inlined_call_operand.vmem [shape: f32[1,128], index: 4, kind: input, shape index: {}]
  %s5 = inlined_call_operand.hbm [shape: f32[512,128], index: 5, kind: output, shape index: {}]
  %s6 = sld [smem:[#allocation0]]
  $region57: #{setop_res_basic_block.1} parent=0
    _
  %s8 = ssub.s32 1, %s6
  %s9 = scalar_select 0, %s8, %s6
  $region1: #{setop_res_basic_block.1} parent=0
    #allocation3 [shape = 'u8[262144]{0}', space=vmem, size = 0x40000, scoped, tag = 'output window, operand 0, single buffered']
    #allocation4 [shape = 's32[2]{0}', space=sflag, size = 0x8, scoped, tag = 'scoped memory for setop_res_basic_block.1']
    %10 = vsyncpa [#allocation4], 0
    loop: start=0, step=1, limit=4
    $region2: #{setop_res_basic_block.1} parent=1 // loop_pre_header
      _
    $region3: #{setop_res_basic_block.1} parent=1 // loop_header
      %s12 = sphi 0, %s16
      %p13 = scmp.ge.s32.totalorder %s12, 4
      %s22 = sphi 0, %s24
      %s25 = sphi 0, %s22
      %s26 = sphi 0, %s25
      %s42 = sphi 0, %s26
      %s46 = sphi 0, %s46
      %s48 = sphi 0, %s46
      %s49 = sphi 0, %s48
      %s63 = sphi 0, %s49
      %s67 = sphi 0, %s67
      %s69 = sphi 0, %s67
      %s70 = sphi 0, %s69
      %s84 = sphi 0, %s70
      %s88 = sphi 0, %s88
      %s90 = sphi 0, %s88
      %s91 = sphi 0, %s90
      %s105 = sphi 0, %s91
      %s109 = sphi 0, %s109
      %s111 = sphi 0, %s109
      %s112 = sphi 0, %s111
      %s126 = sphi 0, %s112
      %s130 = sphi 0, %s130
      %s132 = sphi 0, %s130
      %s133 = sphi 0, %s132
      %s147 = sphi 0, %s133
    $region4: #{setop_res_basic_block.1} parent=1 // loop_header_branch
      %15 = sbr.rel (%p13) target = $region8
    $region5: #{setop_res_basic_block.1} parent=1 // loop_body
      %s17 = ssub.s32 %s12, 1
      %s18 = ssub.s32 %s12, 2
      %s19 = sadd.s32 %s12, 1
      %s20 = ssub.s32 %s12, %s19
      %p21 = scmp.eq.s32.totalorder %s20, 0
      %s23 = sadd.s32 %s22, 1
      %s24 = scalar_select %p21, %s22, %s23
      %p27 = pneg %p21
      %p28 = scmp.eq.s32.totalorder %s12, 1
      %p29 = por %p27, %p28
      %p30 = scmp.ne.s32.totalorder %s22, %s25
      %p31 = scmp.eq.s32.totalorder %s12, 0
      %p32 = por %p30, %p31
      %p33 = scmp.ne.s32.totalorder %s22, %s25
      %p34 = scmp.eq.s32.totalorder %s17, 1
      %p35 = por %p33, %p34
      %p36 = scmp.ne.s32.totalorder %s25, %s26
      %p37 = scmp.eq.s32.totalorder %s17, 0
      %p38 = por %p36, %p37
      %p39 = scmp.ne.s32.totalorder %s25, %s26
      %p40 = scmp.eq.s32.totalorder %s18, 1
      %p41 = por %p39, %p40
      %p43 = scmp.ne.s32.totalorder %s26, %s42
      %p44 = scmp.eq.s32.totalorder %s18, 0
      %p45 = por %p43, %p44
      %s47 = sadd.s32 %s46, 1
      %p50 = scmp.eq.s32.totalorder %s12, 1
      %p51 = scmp.ne.s32.totalorder %s46, %s48
      %p52 = scmp.eq.s32.totalorder %s12, 0
      %p53 = por %p51, %p52
      %p54 = scmp.ne.s32.totalorder %s46, %s48
      %p55 = scmp.eq.s32.totalorder %s17, 1
      %p56 = por %p54, %p55
      %p57 = scmp.ne.s32.totalorder %s48, %s49
      %p58 = scmp.eq.s32.totalorder %s17, 0
      %p59 = por %p57, %p58
      %p60 = scmp.ne.s32.totalorder %s48, %s49
      %p61 = scmp.eq.s32.totalorder %s18, 1
      %p62 = por %p60, %p61
      %p64 = scmp.ne.s32.totalorder %s49, %s63
      %p65 = scmp.eq.s32.totalorder %s18, 0
      %p66 = por %p64, %p65
      %s68 = sadd.s32 %s67, 1
      %p71 = scmp.eq.s32.totalorder %s12, 1
      %p72 = scmp.ne.s32.totalorder %s67, %s69
      %p73 = scmp.eq.s32.totalorder %s12, 0
      %p74 = por %p72, %p73
      %p75 = scmp.ne.s32.totalorder %s67, %s69
      %p76 = scmp.eq.s32.totalorder %s17, 1
      %p77 = por %p75, %p76
      %p78 = scmp.ne.s32.totalorder %s69, %s70
      %p79 = scmp.eq.s32.totalorder %s17, 0
      %p80 = por %p78, %p79
      %p81 = scmp.ne.s32.totalorder %s69, %s70
      %p82 = scmp.eq.s32.totalorder %s18, 1
      %p83 = por %p81, %p82
      %p85 = scmp.ne.s32.totalorder %s70, %s84
      %p86 = scmp.eq.s32.totalorder %s18, 0
      %p87 = por %p85, %p86
      %s89 = sadd.s32 %s88, 1
      %p92 = scmp.eq.s32.totalorder %s12, 1
      %p93 = scmp.ne.s32.totalorder %s88, %s90
      %p94 = scmp.eq.s32.totalorder %s12, 0
      %p95 = por %p93, %p94
      %p96 = scmp.ne.s32.totalorder %s88, %s90
      %p97 = scmp.eq.s32.totalorder %s17, 1
      %p98 = por %p96, %p97
      %p99 = scmp.ne.s32.totalorder %s90, %s91
      %p100 = scmp.eq.s32.totalorder %s17, 0
      %p101 = por %p99, %p100
      %p102 = scmp.ne.s32.totalorder %s90, %s91
      %p103 = scmp.eq.s32.totalorder %s18, 1
      %p104 = por %p102, %p103
      %p106 = scmp.ne.s32.totalorder %s91, %s105
      %p107 = scmp.eq.s32.totalorder %s18, 0
      %p108 = por %p106, %p107
      %s110 = sadd.s32 %s109, 1
      %p113 = scmp.eq.s32.totalorder %s12, 1
      %p114 = scmp.ne.s32.totalorder %s109, %s111
      %p115 = scmp.eq.s32.totalorder %s12, 0
      %p116 = por %p114, %p115
      %p117 = scmp.ne.s32.totalorder %s109, %s111
      %p118 = scmp.eq.s32.totalorder %s17, 1
      %p119 = por %p117, %p118
      %p120 = scmp.ne.s32.totalorder %s111, %s112
      %p121 = scmp.eq.s32.totalorder %s17, 0
      %p122 = por %p120, %p121
      %p123 = scmp.ne.s32.totalorder %s111, %s112
      %p124 = scmp.eq.s32.totalorder %s18, 1
      %p125 = por %p123, %p124
      %p127 = scmp.ne.s32.totalorder %s112, %s126
      %p128 = scmp.eq.s32.totalorder %s18, 0
      %p129 = por %p127, %p128
      %s131 = sadd.s32 %s130, 1
      %p134 = scmp.eq.s32.totalorder %s12, 1
      %p135 = scmp.ne.s32.totalorder %s130, %s132
      %p136 = scmp.eq.s32.totalorder %s12, 0
      %p137 = por %p135, %p136
      %p138 = scmp.ne.s32.totalorder %s130, %s132
      %p139 = scmp.eq.s32.totalorder %s17, 1
      %p140 = por %p138, %p139
      %p141 = scmp.ne.s32.totalorder %s132, %s133
      %p142 = scmp.eq.s32.totalorder %s17, 0
      %p143 = por %p141, %p142
      %p144 = scmp.ne.s32.totalorder %s132, %s133
      %p145 = scmp.eq.s32.totalorder %s18, 1
      %p146 = por %p144, %p145
      %p148 = scmp.ne.s32.totalorder %s133, %s147
      %p149 = scmp.eq.s32.totalorder %s18, 0
      %p150 = por %p148, %p149
      %p151 = scmp.le.s32.totalorder 1, %s12
      %p152 = scmp.lt.s32.totalorder %s12, 3
      %p153 = pnand %p151, %p152
      %p154 = pneg %p153
      // Predicated region
      $region9: #{setop_res_basic_block.1} parent=5 // pred_check
        _
      $region10: #{setop_res_basic_block.1} parent=5 // pred_check_branch
        %156 = sbr.rel (%p153) target = $region12
      $region11: #{setop_res_basic_block.1} parent=5 // pred_region
        %s157 = ssub.s32 %s12, 1
        // Predicated region
        $region13: #{setop_res_basic_block.1} parent=11 // pred_check
          %p158 = pneg %p59
        $region14: #{setop_res_basic_block.1} parent=11 // pred_check_branch
          %160 = sbr.rel (%p158) target = $region16
        $region15: #{setop_res_basic_block.1} parent=11 // pred_region
          _
        $region16: #{setop_res_basic_block.1} parent=11 // pred_fallthru
          _
        // Predicated region
        $region17: #{setop_res_basic_block.1} parent=11 // pred_check
          %p161 = pneg %p80
        $region18: #{setop_res_basic_block.1} parent=11 // pred_check_branch
          %163 = sbr.rel (%p161) target = $region20
        $region19: #{setop_res_basic_block.1} parent=11 // pred_region
          _
        $region20: #{setop_res_basic_block.1} parent=11 // pred_fallthru
          _
        // Predicated region
        $region21: #{setop_res_basic_block.1} parent=11 // pred_check
          %p164 = pneg %p101
        $region22: #{setop_res_basic_block.1} parent=11 // pred_check_branch
          %166 = sbr.rel (%p164) target = $region24
        $region23: #{setop_res_basic_block.1} parent=11 // pred_region
          _
        $region24: #{setop_res_basic_block.1} parent=11 // pred_fallthru
          _
        // Predicated region
        $region25: #{setop_res_basic_block.1} parent=11 // pred_check
          %p167 = pneg %p122
        $region26: #{setop_res_basic_block.1} parent=11 // pred_check_branch
          %169 = sbr.rel (%p167) target = $region28
        $region27: #{setop_res_basic_block.1} parent=11 // pred_region
          _
        $region28: #{setop_res_basic_block.1} parent=11 // pred_fallthru
          _
      $region12: #{setop_res_basic_block.1} parent=5 // pred_fallthru
        _
      %p170 = scmp.lt.s32.totalorder %s12, 2
      // Predicated region
      $region29: #{setop_res_basic_block.1} parent=5 // pred_check
        %p171 = pneg %p170
      $region30: #{setop_res_basic_block.1} parent=5 // pred_check_branch
        %173 = sbr.rel (%p171) target = $region32
      $region31: #{setop_res_basic_block.1} parent=5 // pred_region
        // Predicated region
        $region33: #{setop_res_basic_block.1} parent=31 // pred_check
          %p174 = pneg %p32
        $region34: #{setop_res_basic_block.1} parent=31 // pred_check_branch
          %176 = sbr.rel (%p174) target = $region36
        $region35: #{setop_res_basic_block.1} parent=31 // pred_region
          %s177 = smul.u32 32, %s12
          %p178 = scmp.lt.s32.totalorder %s177, 63
          %s179 = scalar_select %p178, %s177, 63
          %s180 = smul.addr %s179, 4
          %s181 = scalar_lea.vmem %s0, %s180
          %s182 = smul.u32 32, %s12
        $region36: #{setop_res_basic_block.1} parent=31 // pred_fallthru
          _
      $region32: #{setop_res_basic_block.1} parent=5 // pred_fallthru
        _
      %p183 = scmp.le.s32.totalorder 1, %s12
      %p184 = scmp.lt.s32.totalorder %s12, 3
      %p185 = pnand %p183, %p184
      %p186 = pneg %p185
      // Predicated region
      $region37: #{setop_res_basic_block.1} parent=5 // pred_check
        _
      $region38: #{setop_res_basic_block.1} parent=5 // pred_check_branch
        %188 = sbr.rel (%p185) target = $region40
      $region39: #{setop_res_basic_block.1} parent=5 // pred_region
        %s189 = ssub.s32 %s12, 1
        %s190 = smul.u32 32, %s17
        %p191 = scmp.lt.s32.totalorder %s190, 63
        %s192 = scalar_select %p191, %s190, 63
        %s193 = smul.addr %s192, 4
        %s194 = scalar_lea.vmem %s0, %s193
        %p195 = pneg %p38
        %p196 = pneg %p35
        %p197 = pneg %p59
        %p198 = pneg %p56
        %p199 = pneg %p80
        %p200 = pneg %p77
        %p201 = pneg %p101
        %p202 = pneg %p98
        %p203 = pneg %p122
        %p204 = pneg %p119
        %p205 = pneg %p143
        %p206 = pneg %p140
        %s207 = smul.u32 32, %s17
        %p208 = scmp.lt.s32.totalorder %s207, 63
        %s209 = scalar_select %p208, %s207, 63
        %s210 = smul.addr %s209, 4
        %s211 = scalar_lea.vmem %s0, %s210
        %s212 = smul.u32 32, %s17
        %v213 = vld [vmem:[%s211] sm:$0xf]
        %v214 = vld [vmem:[%s211 + $0x4] sm:$0xf]
        %v215 = vld [vmem:[%s211 + $0x8] sm:$0xf]
        %v216 = vld [vmem:[%s211 + $0xc] sm:$0xf]
        %v217 = vld [vmem:[%s211 + $0x10] sm:$0xf]
        %v218 = vld [vmem:[%s211 + $0x14] sm:$0xf]
        %v219 = vld [vmem:[%s211 + $0x18] sm:$0xf]
        %v220 = vld [vmem:[%s211 + $0x1c] sm:$0xf]
        %v221 = vld [vmem:[%s211 + $0x20] sm:$0xf]
        %v222 = vld [vmem:[%s211 + $0x24] sm:$0xf]
        %v223 = vld [vmem:[%s211 + $0x28] sm:$0xf]
        %v224 = vld [vmem:[%s211 + $0x2c] sm:$0xf]
        %v225 = vld [vmem:[%s211 + $0x30] sm:$0xf]
        %v226 = vld [vmem:[%s211 + $0x34] sm:$0xf]
        %v227 = vld [vmem:[%s211 + $0x38] sm:$0xf]
        %v228 = vld [vmem:[%s211 + $0x3c] sm:$0xf]
        %v229 = vld [vmem:[%s211 + $0x40] sm:$0xf]
        %v230 = vld [vmem:[%s211 + $0x44] sm:$0xf]
        %v231 = vld [vmem:[%s211 + $0x48] sm:$0xf]
        %v232 = vld [vmem:[%s211 + $0x4c] sm:$0xf]
        %v233 = vld [vmem:[%s211 + $0x50] sm:$0xf]
        %v234 = vld [vmem:[%s211 + $0x54] sm:$0xf]
        %v235 = vld [vmem:[%s211 + $0x58] sm:$0xf]
        %v236 = vld [vmem:[%s211 + $0x5c] sm:$0xf]
        %v237 = vld [vmem:[%s211 + $0x60] sm:$0xf]
        %v238 = vld [vmem:[%s211 + $0x64] sm:$0xf]
        %v239 = vld [vmem:[%s211 + $0x68] sm:$0xf]
        %v240 = vld [vmem:[%s211 + $0x6c] sm:$0xf]
        %v241 = vld [vmem:[%s211 + $0x70] sm:$0xf]
        %v242 = vld [vmem:[%s211 + $0x74] sm:$0xf]
        %v243 = vld [vmem:[%s211 + $0x78] sm:$0xf]
        %v244 = vld [vmem:[%s211 + $0x7c] sm:$0xf]
        %v245 = vld [vmem:[%s1] sm:$0xf]
        %v246 = vld [vmem:[%s1 + $0x4] sm:$0xf]
        %v247 = vld [vmem:[%s1 + $0x8] sm:$0xf]
        %v248 = vld [vmem:[%s1 + $0xc] sm:$0xf]
        %v249 = vld [vmem:[%s1 + $0x10] sm:$0xf]
        %v250 = vld [vmem:[%s1 + $0x14] sm:$0xf]
        %v251 = vld [vmem:[%s1 + $0x18] sm:$0xf]
        %v252 = vld [vmem:[%s1 + $0x1c] sm:$0xf]
        %v253 = vld [vmem:[%s1 + $0x20] sm:$0xf]
        %v254 = vld [vmem:[%s1 + $0x24] sm:$0xf]
        %v255 = vld [vmem:[%s1 + $0x28] sm:$0xf]
        %v256 = vld [vmem:[%s1 + $0x2c] sm:$0xf]
        %v257 = vld [vmem:[%s1 + $0x30] sm:$0xf]
        %v258 = vld [vmem:[%s1 + $0x34] sm:$0xf]
        %v259 = vld [vmem:[%s1 + $0x38] sm:$0xf]
        %v260 = vld [vmem:[%s1 + $0x3c] sm:$0xf]
        %v293 = vunpack.c.l.b16 %v213
        %v294 = vunpack.c.l.b16 %v214
        %v295 = vunpack.c.l.b16 %v215
        %v296 = vunpack.c.l.b16 %v216
        %v297 = vunpack.c.l.b16 %v217
        %v298 = vunpack.c.l.b16 %v218
        %v299 = vunpack.c.l.b16 %v219
        %v300 = vunpack.c.l.b16 %v220
        %v301 = vunpack.c.l.b16 %v221
        %v302 = vunpack.c.l.b16 %v222
        %v303 = vunpack.c.l.b16 %v223
        %v304 = vunpack.c.l.b16 %v224
        %v305 = vunpack.c.l.b16 %v225
        %v306 = vunpack.c.l.b16 %v226
        %v307 = vunpack.c.l.b16 %v227
        %v308 = vunpack.c.l.b16 %v228
        %v309 = vunpack.c.l.b16 %v229
        %v310 = vunpack.c.l.b16 %v230
        %v311 = vunpack.c.l.b16 %v231
        %v312 = vunpack.c.l.b16 %v232
        %v313 = vunpack.c.l.b16 %v233
        %v314 = vunpack.c.l.b16 %v234
        %v315 = vunpack.c.l.b16 %v235
        %v316 = vunpack.c.l.b16 %v236
        %v317 = vunpack.c.l.b16 %v237
        %v318 = vunpack.c.l.b16 %v238
        %v319 = vunpack.c.l.b16 %v239
        %v320 = vunpack.c.l.b16 %v240
        %v321 = vunpack.c.l.b16 %v241
        %v322 = vunpack.c.l.b16 %v242
        %v323 = vunpack.c.l.b16 %v243
        %v324 = vunpack.c.l.b16 %v244
        %v325 = vpack.c.b16 %v294, %v293
        %v326 = vpack.c.b16 %v296, %v295
        %v327 = vpack.c.b16 %v298, %v297
        %v328 = vpack.c.b16 %v300, %v299
        %v329 = vpack.c.b16 %v302, %v301
        %v330 = vpack.c.b16 %v304, %v303
        %v331 = vpack.c.b16 %v306, %v305
        %v332 = vpack.c.b16 %v308, %v307
        %v333 = vpack.c.b16 %v310, %v309
        %v334 = vpack.c.b16 %v312, %v311
        %v335 = vpack.c.b16 %v314, %v313
        %v336 = vpack.c.b16 %v316, %v315
        %v337 = vpack.c.b16 %v318, %v317
        %v338 = vpack.c.b16 %v320, %v319
        %v339 = vpack.c.b16 %v322, %v321
        %v340 = vpack.c.b16 %v324, %v323
        %v373 = vunpack.c.l.b16 %v245
        %v374 = vunpack.c.l.b16 %v246
        %v375 = vunpack.c.l.b16 %v247
        %v376 = vunpack.c.l.b16 %v248
        %v377 = vunpack.c.l.b16 %v249
        %v378 = vunpack.c.l.b16 %v250
        %v379 = vunpack.c.l.b16 %v251
        %v380 = vunpack.c.l.b16 %v252
        %v381 = vunpack.c.l.b16 %v253
        %v382 = vunpack.c.l.b16 %v254
        %v383 = vunpack.c.l.b16 %v255
        %v384 = vunpack.c.l.b16 %v256
        %v385 = vunpack.c.l.b16 %v257
        %v386 = vunpack.c.l.b16 %v258
        %v387 = vunpack.c.l.b16 %v259
        %v388 = vunpack.c.l.b16 %v260
        %v389 = vpack.c.b16 %v374, %v373
        %v390 = vpack.c.b16 %v376, %v375
        %v391 = vpack.c.b16 %v378, %v377
        %v392 = vpack.c.b16 %v380, %v379
        %v393 = vpack.c.b16 %v382, %v381
        %v394 = vpack.c.b16 %v384, %v383
        %v395 = vpack.c.b16 %v386, %v385
        %v396 = vpack.c.b16 %v388, %v387
        %405 = vmatpush.bf16.msra.mxu0 %v396
        %406 = vmatpush.bf16.msra.mxu0 %v395
        %407 = vmatpush.bf16.msra.mxu0 %v394
        %408 = vmatpush.bf16.msra.mxu0 %v393
        %409 = vmatpush.bf16.msra.mxu0 %v392
        %410 = vmatpush.bf16.msra.mxu0 %v391
        %411 = vmatpush.bf16.msra.mxu0 %v390
        %412 = vmatpush.bf16.msra.mxu0 %v389
        %413 = vmatmul.bf16.gmra.mxu0 %v325
        %v414 = vpop.f32.mrf.mxu0
        %v415 = vadd.f32 0.0, %v414
        %v416 = vpop.f32.mrf.mxu0
        %v417 = vadd.f32 0.0, %v416
        %418 = vmatmul.bf16.gmra.mxu0 %v326
        %v419 = vpop.f32.mrf.mxu0
        %v420 = vadd.f32 0.0, %v419
        %v421 = vpop.f32.mrf.mxu0
        %v422 = vadd.f32 0.0, %v421
        %423 = vmatmul.bf16.gmra.mxu0 %v327
        %v424 = vpop.f32.mrf.mxu0
        %v425 = vadd.f32 0.0, %v424
        %v426 = vpop.f32.mrf.mxu0
        %v427 = vadd.f32 0.0, %v426
        %428 = vmatmul.bf16.gmra.mxu0 %v328
        %v429 = vpop.f32.mrf.mxu0
        %v430 = vadd.f32 0.0, %v429
        %v431 = vpop.f32.mrf.mxu0
        %v432 = vadd.f32 0.0, %v431
        %433 = vmatmul.bf16.gmra.mxu0 %v329
        %v434 = vpop.f32.mrf.mxu0
        %v435 = vadd.f32 0.0, %v434
        %v436 = vpop.f32.mrf.mxu0
        %v437 = vadd.f32 0.0, %v436
        %438 = vmatmul.bf16.gmra.mxu0 %v330
        %v439 = vpop.f32.mrf.mxu0
        %v440 = vadd.f32 0.0, %v439
        %v441 = vpop.f32.mrf.mxu0
        %v442 = vadd.f32 0.0, %v441
        %443 = vmatmul.bf16.gmra.mxu0 %v331
        %v444 = vpop.f32.mrf.mxu0
        %v445 = vadd.f32 0.0, %v444
        %v446 = vpop.f32.mrf.mxu0
        %v447 = vadd.f32 0.0, %v446
        %448 = vmatmul.bf16.gmra.mxu0 %v332
        %v449 = vpop.f32.mrf.mxu0
        %v450 = vadd.f32 0.0, %v449
        %v451 = vpop.f32.mrf.mxu0
        %v452 = vadd.f32 0.0, %v451
        %453 = vmatmul.bf16.gmra.mxu0 %v333
        %v454 = vpop.f32.mrf.mxu0
        %v455 = vadd.f32 0.0, %v454
        %v456 = vpop.f32.mrf.mxu0
        %v457 = vadd.f32 0.0, %v456
        %458 = vmatmul.bf16.gmra.mxu0 %v334
        %v459 = vpop.f32.mrf.mxu0
        %v460 = vadd.f32 0.0, %v459
        %v461 = vpop.f32.mrf.mxu0
        %v462 = vadd.f32 0.0, %v461
        %463 = vmatmul.bf16.gmra.mxu0 %v335
        %v464 = vpop.f32.mrf.mxu0
        %v465 = vadd.f32 0.0, %v464
        %v466 = vpop.f32.mrf.mxu0
        %v467 = vadd.f32 0.0, %v466
        %468 = vmatmul.bf16.gmra.mxu0 %v336
        %v469 = vpop.f32.mrf.mxu0
        %v470 = vadd.f32 0.0, %v469
        %v471 = vpop.f32.mrf.mxu0
        %v472 = vadd.f32 0.0, %v471
        %473 = vmatmul.bf16.gmra.mxu0 %v337
        %v474 = vpop.f32.mrf.mxu0
        %v475 = vadd.f32 0.0, %v474
        %v476 = vpop.f32.mrf.mxu0
        %v477 = vadd.f32 0.0, %v476
        %478 = vmatmul.bf16.gmra.mxu0 %v338
        %v479 = vpop.f32.mrf.mxu0
        %v480 = vadd.f32 0.0, %v479
        %v481 = vpop.f32.mrf.mxu0
        %v482 = vadd.f32 0.0, %v481
        %483 = vmatmul.bf16.gmra.mxu0 %v339
        %v484 = vpop.f32.mrf.mxu0
        %v485 = vadd.f32 0.0, %v484
        %v486 = vpop.f32.mrf.mxu0
        %v487 = vadd.f32 0.0, %v486
        %488 = vmatmul.bf16.gmra.mxu0 %v340
        %v489 = vpop.f32.mrf.mxu0
        %v490 = vadd.f32 0.0, %v489
        %v491 = vpop.f32.mrf.mxu0
        %v492 = vadd.f32 0.0, %v491
        %493 = vdwg.mxu0
        %s494 = smul.u32 %s17, 256
        %s495 = scalar_lea.vmem [#allocation2], %s494
        %496 = vst [vmem:[%s495] sm:$0xff] %v415
        %497 = vst [vmem:[%s495 + $0x8] sm:$0xff] %v417
        %498 = vst [vmem:[%s495 + $0x10] sm:$0xff] %v420
        %499 = vst [vmem:[%s495 + $0x18] sm:$0xff] %v422
        %500 = vst [vmem:[%s495 + $0x20] sm:$0xff] %v425
        %501 = vst [vmem:[%s495 + $0x28] sm:$0xff] %v427
        %502 = vst [vmem:[%s495 + $0x30] sm:$0xff] %v430
        %503 = vst [vmem:[%s495 + $0x38] sm:$0xff] %v432
        %504 = vst [vmem:[%s495 + $0x40] sm:$0xff] %v435
        %505 = vst [vmem:[%s495 + $0x48] sm:$0xff] %v437
        %506 = vst [vmem:[%s495 + $0x50] sm:$0xff] %v440
        %507 = vst [vmem:[%s495 + $0x58] sm:$0xff] %v442
        %508 = vst [vmem:[%s495 + $0x60] sm:$0xff] %v445
        %509 = vst [vmem:[%s495 + $0x68] sm:$0xff] %v447
        %510 = vst [vmem:[%s495 + $0x70] sm:$0xff] %v450
        %511 = vst [vmem:[%s495 + $0x78] sm:$0xff] %v452
        %512 = vst [vmem:[%s495 + $0x80] sm:$0xff] %v455
        %513 = vst [vmem:[%s495 + $0x88] sm:$0xff] %v457
        %514 = vst [vmem:[%s495 + $0x90] sm:$0xff] %v460
        %515 = vst [vmem:[%s495 + $0x98] sm:$0xff] %v462
        %516 = vst [vmem:[%s495 + $0xa0] sm:$0xff] %v465
        %517 = vst [vmem:[%s495 + $0xa8] sm:$0xff] %v467
        %518 = vst [vmem:[%s495 + $0xb0] sm:$0xff] %v470
        %519 = vst [vmem:[%s495 + $0xb8] sm:$0xff] %v472
        %520 = vst [vmem:[%s495 + $0xc0] sm:$0xff] %v475
        %521 = vst [vmem:[%s495 + $0xc8] sm:$0xff] %v477
        %522 = vst [vmem:[%s495 + $0xd0] sm:$0xff] %v480
        %523 = vst [vmem:[%s495 + $0xd8] sm:$0xff] %v482
        %524 = vst [vmem:[%s495 + $0xe0] sm:$0xff] %v485
        %525 = vst [vmem:[%s495 + $0xe8] sm:$0xff] %v487
        %526 = vst [vmem:[%s495 + $0xf0] sm:$0xff] %v490
        %527 = vst [vmem:[%s495 + $0xf8] sm:$0xff] %v492
        %p528 = scmp.eq.s32.totalorder %s17, 1
        // Predicated region
        $region41: #{setop_res_basic_block.1} parent=39 // pred_check
          %p529 = pneg %p528
        $region42: #{setop_res_basic_block.1} parent=39 // pred_check_branch
          %531 = sbr.rel (%p529) target = $region44
        $region43: #{setop_res_basic_block.1} parent=39 // pred_region
          %v532 = vld [vmem:[#allocation2] sm:$0xff]
          %v533 = vld [vmem:[#allocation2 + $0x8] sm:$0xff]
          %v534 = vld [vmem:[#allocation2 + $0x10] sm:$0xff]
          %v535 = vld [vmem:[#allocation2 + $0x18] sm:$0xff]
          %v536 = vld [vmem:[#allocation2 + $0x20] sm:$0xff]
          %v537 = vld [vmem:[#allocation2 + $0x28] sm:$0xff]
          %v538 = vld [vmem:[#allocation2 + $0x30] sm:$0xff]
          %v539 = vld [vmem:[#allocation2 + $0x38] sm:$0xff]
          %v540 = vld [vmem:[#allocation2 + $0x40] sm:$0xff]
          %v541 = vld [vmem:[#allocation2 + $0x48] sm:$0xff]
          %v542 = vld [vmem:[#allocation2 + $0x50] sm:$0xff]
          %v543 = vld [vmem:[#allocation2 + $0x58] sm:$0xff]
          %v544 = vld [vmem:[#allocation2 + $0x60] sm:$0xff]
          %v545 = vld [vmem:[#allocation2 + $0x68] sm:$0xff]
          %v546 = vld [vmem:[#allocation2 + $0x70] sm:$0xff]
          %v547 = vld [vmem:[#allocation2 + $0x78] sm:$0xff]
          %v548 = vld [vmem:[#allocation2 + $0x80] sm:$0xff]
          %v549 = vld [vmem:[#allocation2 + $0x88] sm:$0xff]
          %v550 = vld [vmem:[#allocation2 + $0x90] sm:$0xff]
          %v551 = vld [vmem:[#allocation2 + $0x98] sm:$0xff]
          %v552 = vld [vmem:[#allocation2 + $0xa0] sm:$0xff]
          %v553 = vld [vmem:[#allocation2 + $0xa8] sm:$0xff]
          %v554 = vld [vmem:[#allocation2 + $0xb0] sm:$0xff]
          %v555 = vld [vmem:[#allocation2 + $0xb8] sm:$0xff]
          %v556 = vld [vmem:[#allocation2 + $0xc0] sm:$0xff]
          %v557 = vld [vmem:[#allocation2 + $0xc8] sm:$0xff]
          %v558 = vld [vmem:[#allocation2 + $0xd0] sm:$0xff]
          %v559 = vld [vmem:[#allocation2 + $0xd8] sm:$0xff]
          %v560 = vld [vmem:[#allocation2 + $0xe0] sm:$0xff]
          %v561 = vld [vmem:[#allocation2 + $0xe8] sm:$0xff]
          %v562 = vld [vmem:[#allocation2 + $0xf0] sm:$0xff]
          %v563 = vld [vmem:[#allocation2 + $0xf8] sm:$0xff]
          %v564 = vld [vmem:[#allocation2 + $0x100] sm:$0xff]
          %v565 = vld [vmem:[#allocation2 + $0x108] sm:$0xff]
          %v566 = vld [vmem:[#allocation2 + $0x110] sm:$0xff]
          %v567 = vld [vmem:[#allocation2 + $0x118] sm:$0xff]
          %v568 = vld [vmem:[#allocation2 + $0x120] sm:$0xff]
          %v569 = vld [vmem:[#allocation2 + $0x128] sm:$0xff]
          %v570 = vld [vmem:[#allocation2 + $0x130] sm:$0xff]
          %v571 = vld [vmem:[#allocation2 + $0x138] sm:$0xff]
          %v572 = vld [vmem:[#allocation2 + $0x140] sm:$0xff]
          %v573 = vld [vmem:[#allocation2 + $0x148] sm:$0xff]
          %v574 = vld [vmem:[#allocation2 + $0x150] sm:$0xff]
          %v575 = vld [vmem:[#allocation2 + $0x158] sm:$0xff]
          %v576 = vld [vmem:[#allocation2 + $0x160] sm:$0xff]
          %v577 = vld [vmem:[#allocation2 + $0x168] sm:$0xff]
          %v578 = vld [vmem:[#allocation2 + $0x170] sm:$0xff]
          %v579 = vld [vmem:[#allocation2 + $0x178] sm:$0xff]
          %v580 = vld [vmem:[#allocation2 + $0x180] sm:$0xff]
          %v581 = vld [vmem:[#allocation2 + $0x188] sm:$0xff]
          %v582 = vld [vmem:[#allocation2 + $0x190] sm:$0xff]
          %v583 = vld [vmem:[#allocation2 + $0x198] sm:$0xff]
          %v584 = vld [vmem:[#allocation2 + $0x1a0] sm:$0xff]
          %v585 = vld [vmem:[#allocation2 + $0x1a8] sm:$0xff]
          %v586 = vld [vmem:[#allocation2 + $0x1b0] sm:$0xff]
          %v587 = vld [vmem:[#allocation2 + $0x1b8] sm:$0xff]
          %v588 = vld [vmem:[#allocation2 + $0x1c0] sm:$0xff]
          %v589 = vld [vmem:[#allocation2 + $0x1c8] sm:$0xff]
          %v590 = vld [vmem:[#allocation2 + $0x1d0] sm:$0xff]
          %v591 = vld [vmem:[#allocation2 + $0x1d8] sm:$0xff]
          %v592 = vld [vmem:[#allocation2 + $0x1e0] sm:$0xff]
          %v593 = vld [vmem:[#allocation2 + $0x1e8] sm:$0xff]
          %v594 = vld [vmem:[#allocation2 + $0x1f0] sm:$0xff]
          %v595 = vld [vmem:[#allocation2 + $0x1f8] sm:$0xff]
          %v596 = vadd.f32 %v532, %v533
          %v597 = vadd.f32 %v596, %v534
          %v598 = vadd.f32 %v597, %v535
          %v599 = vadd.f32 %v598, %v536
          %v600 = vadd.f32 %v599, %v537
          %v601 = vadd.f32 %v600, %v538
          %v602 = vadd.f32 %v601, %v539
          %v603 = vadd.f32 %v602, %v540
          %v604 = vadd.f32 %v603, %v541
          %v605 = vadd.f32 %v604, %v542
          %v606 = vadd.f32 %v605, %v543
          %v607 = vadd.f32 %v606, %v544
          %v608 = vadd.f32 %v607, %v545
          %v609 = vadd.f32 %v608, %v546
          %v610 = vadd.f32 %v609, %v547
          %v611 = vadd.f32 %v610, %v548
          %v612 = vadd.f32 %v611, %v549
          %v613 = vadd.f32 %v612, %v550
          %v614 = vadd.f32 %v613, %v551
          %v615 = vadd.f32 %v614, %v552
          %v616 = vadd.f32 %v615, %v553
          %v617 = vadd.f32 %v616, %v554
          %v618 = vadd.f32 %v617, %v555
          %v619 = vadd.f32 %v618, %v556
          %v620 = vadd.f32 %v619, %v557
          %v621 = vadd.f32 %v620, %v558
          %v622 = vadd.f32 %v621, %v559
          %v623 = vadd.f32 %v622, %v560
          %v624 = vadd.f32 %v623, %v561
          %v625 = vadd.f32 %v624, %v562
          %v626 = vadd.f32 %v625, %v563
          %v627 = vadd.f32 %v626, %v564
          %v628 = vadd.f32 %v627, %v565
          %v629 = vadd.f32 %v628, %v566
          %v630 = vadd.f32 %v629, %v567
          %v631 = vadd.f32 %v630, %v568
          %v632 = vadd.f32 %v631, %v569
          %v633 = vadd.f32 %v632, %v570
          %v634 = vadd.f32 %v633, %v571
          %v635 = vadd.f32 %v634, %v572
          %v636 = vadd.f32 %v635, %v573
          %v637 = vadd.f32 %v636, %v574
          %v638 = vadd.f32 %v637, %v575
          %v639 = vadd.f32 %v638, %v576
          %v640 = vadd.f32 %v639, %v577
          %v641 = vadd.f32 %v640, %v578
          %v642 = vadd.f32 %v641, %v579
          %v643 = vadd.f32 %v642, %v580
          %v644 = vadd.f32 %v643, %v581
          %v645 = vadd.f32 %v644, %v582
          %v646 = vadd.f32 %v645, %v583
          %v647 = vadd.f32 %v646, %v584
          %v648 = vadd.f32 %v647, %v585
          %v649 = vadd.f32 %v648, %v586
          %v650 = vadd.f32 %v649, %v587
          %v651 = vadd.f32 %v650, %v588
          %v652 = vadd.f32 %v651, %v589
          %v653 = vadd.f32 %v652, %v590
          %v654 = vadd.f32 %v653, %v591
          %v655 = vadd.f32 %v654, %v592
          %v656 = vadd.f32 %v655, %v593
          %v657 = vadd.f32 %v656, %v594
          %v658 = vadd.f32 %v657, %v595
          %v659 = vrot.slane %v658, 4
          %v660 = vadd.f32 %v658, %v659
          %v661 = vrot.slane %v660, 2
          %v662 = vadd.f32 %v660, %v661
          %v663 = vrot.slane %v662, 1
          %v664 = vadd.f32 %v662, %v663
          %v665 = vmul.f32 %v664, 0.001953125
          %v666 = vsub.f32 %v532, %v665
          %v667 = vsub.f32 %v533, %v665
          %v668 = vsub.f32 %v534, %v665
          %v669 = vsub.f32 %v535, %v665
          %v670 = vsub.f32 %v536, %v665
          %v671 = vsub.f32 %v537, %v665
          %v672 = vsub.f32 %v538, %v665
          %v673 = vsub.f32 %v539, %v665
          %v674 = vsub.f32 %v540, %v665
          %v675 = vsub.f32 %v541, %v665
          %v676 = vsub.f32 %v542, %v665
          %v677 = vsub.f32 %v543, %v665
          %v678 = vsub.f32 %v544, %v665
          %v679 = vsub.f32 %v545, %v665
          %v680 = vsub.f32 %v546, %v665
          %v681 = vsub.f32 %v547, %v665
          %v682 = vsub.f32 %v548, %v665
          %v683 = vsub.f32 %v549, %v665
          %v684 = vsub.f32 %v550, %v665
          %v685 = vsub.f32 %v551, %v665
          %v686 = vsub.f32 %v552, %v665
          %v687 = vsub.f32 %v553, %v665
          %v688 = vsub.f32 %v554, %v665
          %v689 = vsub.f32 %v555, %v665
          %v690 = vsub.f32 %v556, %v665
          %v691 = vsub.f32 %v557, %v665
          %v692 = vsub.f32 %v558, %v665
          %v693 = vsub.f32 %v559, %v665
          %v694 = vsub.f32 %v560, %v665
          %v695 = vsub.f32 %v561, %v665
          %v696 = vsub.f32 %v562, %v665
          %v697 = vsub.f32 %v563, %v665
          %v698 = vsub.f32 %v564, %v665
          %v699 = vsub.f32 %v565, %v665
          %v700 = vsub.f32 %v566, %v665
          %v701 = vsub.f32 %v567, %v665
          %v702 = vsub.f32 %v568, %v665
          %v703 = vsub.f32 %v569, %v665
          %v704 = vsub.f32 %v570, %v665
          %v705 = vsub.f32 %v571, %v665
          %v706 = vsub.f32 %v572, %v665
          %v707 = vsub.f32 %v573, %v665
          %v708 = vsub.f32 %v574, %v665
          %v709 = vsub.f32 %v575, %v665
          %v710 = vsub.f32 %v576, %v665
          %v711 = vsub.f32 %v577, %v665
          %v712 = vsub.f32 %v578, %v665
          %v713 = vsub.f32 %v579, %v665
          %v714 = vsub.f32 %v580, %v665
          %v715 = vsub.f32 %v581, %v665
          %v716 = vsub.f32 %v582, %v665
          %v717 = vsub.f32 %v583, %v665
          %v718 = vsub.f32 %v584, %v665
          %v719 = vsub.f32 %v585, %v665
          %v720 = vsub.f32 %v586, %v665
          %v721 = vsub.f32 %v587, %v665
          %v722 = vsub.f32 %v588, %v665
          %v723 = vsub.f32 %v589, %v665
          %v724 = vsub.f32 %v590, %v665
          %v725 = vsub.f32 %v591, %v665
          %v726 = vsub.f32 %v592, %v665
          %v727 = vsub.f32 %v593, %v665
          %v728 = vsub.f32 %v594, %v665
          %v729 = vsub.f32 %v595, %v665
          %v730 = vmul.f32 %v666, %v666
          %v731 = vmul.f32 %v667, %v667
          %v732 = vmul.f32 %v668, %v668
          %v733 = vmul.f32 %v669, %v669
          %v734 = vmul.f32 %v670, %v670
          %v735 = vmul.f32 %v671, %v671
          %v736 = vmul.f32 %v672, %v672
          %v737 = vmul.f32 %v673, %v673
          %v738 = vmul.f32 %v674, %v674
          %v739 = vmul.f32 %v675, %v675
          %v740 = vmul.f32 %v676, %v676
          %v741 = vmul.f32 %v677, %v677
          %v742 = vmul.f32 %v678, %v678
          %v743 = vmul.f32 %v679, %v679
          %v744 = vmul.f32 %v680, %v680
          %v745 = vmul.f32 %v681, %v681
          %v746 = vmul.f32 %v682, %v682
          %v747 = vmul.f32 %v683, %v683
          %v748 = vmul.f32 %v684, %v684
          %v749 = vmul.f32 %v685, %v685
          %v750 = vmul.f32 %v686, %v686
          %v751 = vmul.f32 %v687, %v687
          %v752 = vmul.f32 %v688, %v688
          %v753 = vmul.f32 %v689, %v689
          %v754 = vmul.f32 %v690, %v690
          %v755 = vmul.f32 %v691, %v691
          %v756 = vmul.f32 %v692, %v692
          %v757 = vmul.f32 %v693, %v693
          %v758 = vmul.f32 %v694, %v694
          %v759 = vmul.f32 %v695, %v695
          %v760 = vmul.f32 %v696, %v696
          %v761 = vmul.f32 %v697, %v697
          %v762 = vmul.f32 %v698, %v698
          %v763 = vmul.f32 %v699, %v699
          %v764 = vmul.f32 %v700, %v700
          %v765 = vmul.f32 %v701, %v701
          %v766 = vmul.f32 %v702, %v702
          %v767 = vmul.f32 %v703, %v703
          %v768 = vmul.f32 %v704, %v704
          %v769 = vmul.f32 %v705, %v705
          %v770 = vmul.f32 %v706, %v706
          %v771 = vmul.f32 %v707, %v707
          %v772 = vmul.f32 %v708, %v708
          %v773 = vmul.f32 %v709, %v709
          %v774 = vmul.f32 %v710, %v710
          %v775 = vmul.f32 %v711, %v711
          %v776 = vmul.f32 %v712, %v712
          %v777 = vmul.f32 %v713, %v713
          %v778 = vmul.f32 %v714, %v714
          %v779 = vmul.f32 %v715, %v715
          %v780 = vmul.f32 %v716, %v716
          %v781 = vmul.f32 %v717, %v717
          %v782 = vmul.f32 %v718, %v718
          %v783 = vmul.f32 %v719, %v719
          %v784 = vmul.f32 %v720, %v720
          %v785 = vmul.f32 %v721, %v721
          %v786 = vmul.f32 %v722, %v722
          %v787 = vmul.f32 %v723, %v723
          %v788 = vmul.f32 %v724, %v724
          %v789 = vmul.f32 %v725, %v725
          %v790 = vmul.f32 %v726, %v726
          %v791 = vmul.f32 %v727, %v727
          %v792 = vmul.f32 %v728, %v728
          %v793 = vmul.f32 %v729, %v729
          %v794 = vadd.f32 %v730, %v731
          %v795 = vadd.f32 %v794, %v732
          %v796 = vadd.f32 %v795, %v733
          %v797 = vadd.f32 %v796, %v734
          %v798 = vadd.f32 %v797, %v735
          %v799 = vadd.f32 %v798, %v736
          %v800 = vadd.f32 %v799, %v737
          %v801 = vadd.f32 %v800, %v738
          %v802 = vadd.f32 %v801, %v739
          %v803 = vadd.f32 %v802, %v740
          %v804 = vadd.f32 %v803, %v741
          %v805 = vadd.f32 %v804, %v742
          %v806 = vadd.f32 %v805, %v743
          %v807 = vadd.f32 %v806, %v744
          %v808 = vadd.f32 %v807, %v745
          %v809 = vadd.f32 %v808, %v746
          %v810 = vadd.f32 %v809, %v747
          %v811 = vadd.f32 %v810, %v748
          %v812 = vadd.f32 %v811, %v749
          %v813 = vadd.f32 %v812, %v750
          %v814 = vadd.f32 %v813, %v751
          %v815 = vadd.f32 %v814, %v752
          %v816 = vadd.f32 %v815, %v753
          %v817 = vadd.f32 %v816, %v754
          %v818 = vadd.f32 %v817, %v755
          %v819 = vadd.f32 %v818, %v756
          %v820 = vadd.f32 %v819, %v757
          %v821 = vadd.f32 %v820, %v758
          %v822 = vadd.f32 %v821, %v759
          %v823 = vadd.f32 %v822, %v760
          %v824 = vadd.f32 %v823, %v761
          %v825 = vadd.f32 %v824, %v762
          %v826 = vadd.f32 %v825, %v763
          %v827 = vadd.f32 %v826, %v764
          %v828 = vadd.f32 %v827, %v765
          %v829 = vadd.f32 %v828, %v766
          %v830 = vadd.f32 %v829, %v767
          %v831 = vadd.f32 %v830, %v768
          %v832 = vadd.f32 %v831, %v769
          %v833 = vadd.f32 %v832, %v770
          %v834 = vadd.f32 %v833, %v771
          %v835 = vadd.f32 %v834, %v772
          %v836 = vadd.f32 %v835, %v773
          %v837 = vadd.f32 %v836, %v774
          %v838 = vadd.f32 %v837, %v775
          %v839 = vadd.f32 %v838, %v776
          %v840 = vadd.f32 %v839, %v777
          %v841 = vadd.f32 %v840, %v778
          %v842 = vadd.f32 %v841, %v779
          %v843 = vadd.f32 %v842, %v780
          %v844 = vadd.f32 %v843, %v781
          %v845 = vadd.f32 %v844, %v782
          %v846 = vadd.f32 %v845, %v783
          %v847 = vadd.f32 %v846, %v784
          %v848 = vadd.f32 %v847, %v785
          %v849 = vadd.f32 %v848, %v786
          %v850 = vadd.f32 %v849, %v787
          %v851 = vadd.f32 %v850, %v788
          %v852 = vadd.f32 %v851, %v789
          %v853 = vadd.f32 %v852, %v790
          %v854 = vadd.f32 %v853, %v791
          %v855 = vadd.f32 %v854, %v792
          %v856 = vadd.f32 %v855, %v793
          %v857 = vrot.slane %v856, 4
          %v858 = vadd.f32 %v856, %v857
          %v859 = vrot.slane %v858, 2
          %v860 = vadd.f32 %v858, %v859
          %v861 = vrot.slane %v860, 1
          %v862 = vadd.f32 %v860, %v861
          %v863 = vmul.f32 %v862, 0.001953125
          %v864 = vld [vmem:[%s3] sm:$0x1]
          %v865 = vadd.f32 %v863, 1e-05
          %v866 = vrsqrt.pop %v865
          %v867 = vmul.f32 %v866, %v865
          %v868 = vmul.f32 %v867, %v866
          %v869 = vmul.f32 0.5, %v868
          %v870 = vsub.f32 1.5, %v869
          %v871 = vmul.f32 %v866, %v870
          %vm872 = vweird.f32 %v865
          %vm873 = vweird.f32 %v866
          %vm874 = vmor %vm872, %vm873
          %v875 = vsel %vm874, %v866, %v871
          %v876 = vmul.f32 %v864, %v875
          %v878 = vperm.slane %v876, 0
          %v880 = vmul.f32 %v666, %v878
          %v881 = vmul.f32 %v667, %v878
          %v882 = vmul.f32 %v668, %v878
          %v883 = vmul.f32 %v669, %v878
          %v884 = vmul.f32 %v670, %v878
          %v885 = vmul.f32 %v671, %v878
          %v886 = vmul.f32 %v672, %v878
          %v887 = vmul.f32 %v673, %v878
          %v888 = vmul.f32 %v674, %v878
          %v889 = vmul.f32 %v675, %v878
          %v890 = vmul.f32 %v676, %v878
          %v891 = vmul.f32 %v677, %v878
          %v892 = vmul.f32 %v678, %v878
          %v893 = vmul.f32 %v679, %v878
          %v894 = vmul.f32 %v680, %v878
          %v895 = vmul.f32 %v681, %v878
          %v896 = vmul.f32 %v682, %v878
          %v897 = vmul.f32 %v683, %v878
          %v898 = vmul.f32 %v684, %v878
          %v899 = vmul.f32 %v685, %v878
          %v900 = vmul.f32 %v686, %v878
          %v901 = vmul.f32 %v687, %v878
          %v902 = vmul.f32 %v688, %v878
          %v903 = vmul.f32 %v689, %v878
          %v904 = vmul.f32 %v690, %v878
          %v905 = vmul.f32 %v691, %v878
          %v906 = vmul.f32 %v692, %v878
          %v907 = vmul.f32 %v693, %v878
          %v908 = vmul.f32 %v694, %v878
          %v909 = vmul.f32 %v695, %v878
          %v910 = vmul.f32 %v696, %v878
          %v911 = vmul.f32 %v697, %v878
          %v912 = vmul.f32 %v698, %v878
          %v913 = vmul.f32 %v699, %v878
          %v914 = vmul.f32 %v700, %v878
          %v915 = vmul.f32 %v701, %v878
          %v916 = vmul.f32 %v702, %v878
          %v917 = vmul.f32 %v703, %v878
          %v918 = vmul.f32 %v704, %v878
          %v919 = vmul.f32 %v705, %v878
          %v920 = vmul.f32 %v706, %v878
          %v921 = vmul.f32 %v707, %v878
          %v922 = vmul.f32 %v708, %v878
          %v923 = vmul.f32 %v709, %v878
          %v924 = vmul.f32 %v710, %v878
          %v925 = vmul.f32 %v711, %v878
          %v926 = vmul.f32 %v712, %v878
          %v927 = vmul.f32 %v713, %v878
          %v928 = vmul.f32 %v714, %v878
          %v929 = vmul.f32 %v715, %v878
          %v930 = vmul.f32 %v716, %v878
          %v931 = vmul.f32 %v717, %v878
          %v932 = vmul.f32 %v718, %v878
          %v933 = vmul.f32 %v719, %v878
          %v934 = vmul.f32 %v720, %v878
          %v935 = vmul.f32 %v721, %v878
          %v936 = vmul.f32 %v722, %v878
          %v937 = vmul.f32 %v723, %v878
          %v938 = vmul.f32 %v724, %v878
          %v939 = vmul.f32 %v725, %v878
          %v940 = vmul.f32 %v726, %v878
          %v941 = vmul.f32 %v727, %v878
          %v942 = vmul.f32 %v728, %v878
          %v943 = vmul.f32 %v729, %v878
          %v944 = vld [vmem:[%s4] sm:$0x1]
          %v946 = vperm.slane %v944, 0
          %v948 = vadd.f32 %v880, %v946
          %v949 = vadd.f32 %v881, %v946
          %v950 = vadd.f32 %v882, %v946
          %v951 = vadd.f32 %v883, %v946
          %v952 = vadd.f32 %v884, %v946
          %v953 = vadd.f32 %v885, %v946
          %v954 = vadd.f32 %v886, %v946
          %v955 = vadd.f32 %v887, %v946
          %v956 = vadd.f32 %v888, %v946
          %v957 = vadd.f32 %v889, %v946
          %v958 = vadd.f32 %v890, %v946
          %v959 = vadd.f32 %v891, %v946
          %v960 = vadd.f32 %v892, %v946
          %v961 = vadd.f32 %v893, %v946
          %v962 = vadd.f32 %v894, %v946
          %v963 = vadd.f32 %v895, %v946
          %v964 = vadd.f32 %v896, %v946
          %v965 = vadd.f32 %v897, %v946
          %v966 = vadd.f32 %v898, %v946
          %v967 = vadd.f32 %v899, %v946
          %v968 = vadd.f32 %v900, %v946
          %v969 = vadd.f32 %v901, %v946
          %v970 = vadd.f32 %v902, %v946
          %v971 = vadd.f32 %v903, %v946
          %v972 = vadd.f32 %v904, %v946
          %v973 = vadd.f32 %v905, %v946
          %v974 = vadd.f32 %v906, %v946
          %v975 = vadd.f32 %v907, %v946
          %v976 = vadd.f32 %v908, %v946
          %v977 = vadd.f32 %v909, %v946
          %v978 = vadd.f32 %v910, %v946
          %v979 = vadd.f32 %v911, %v946
          %v980 = vadd.f32 %v912, %v946
          %v981 = vadd.f32 %v913, %v946
          %v982 = vadd.f32 %v914, %v946
          %v983 = vadd.f32 %v915, %v946
          %v984 = vadd.f32 %v916, %v946
          %v985 = vadd.f32 %v917, %v946
          %v986 = vadd.f32 %v918, %v946
          %v987 = vadd.f32 %v919, %v946
          %v988 = vadd.f32 %v920, %v946
          %v989 = vadd.f32 %v921, %v946
          %v990 = vadd.f32 %v922, %v946
          %v991 = vadd.f32 %v923, %v946
          %v992 = vadd.f32 %v924, %v946
          %v993 = vadd.f32 %v925, %v946
          %v994 = vadd.f32 %v926, %v946
          %v995 = vadd.f32 %v927, %v946
          %v996 = vadd.f32 %v928, %v946
          %v997 = vadd.f32 %v929, %v946
          %v998 = vadd.f32 %v930, %v946
          %v999 = vadd.f32 %v931, %v946
          %v1000 = vadd.f32 %v932, %v946
          %v1001 = vadd.f32 %v933, %v946
          %v1002 = vadd.f32 %v934, %v946
          %v1003 = vadd.f32 %v935, %v946
          %v1004 = vadd.f32 %v936, %v946
          %v1005 = vadd.f32 %v937, %v946
          %v1006 = vadd.f32 %v938, %v946
          %v1007 = vadd.f32 %v939, %v946
          %v1008 = vadd.f32 %v940, %v946
          %v1009 = vadd.f32 %v941, %v946
          %v1010 = vadd.f32 %v942, %v946
          %v1011 = vadd.f32 %v943, %v946
          %v1012 = vld [vmem:[%s2] sm:$0xff]
          %v1013 = vld [vmem:[%s2 + $0x8] sm:$0xff]
          %v1014 = vld [vmem:[%s2 + $0x10] sm:$0xff]
          %v1015 = vld [vmem:[%s2 + $0x18] sm:$0xff]
          %v1016 = vld [vmem:[%s2 + $0x20] sm:$0xff]
          %v1017 = vld [vmem:[%s2 + $0x28] sm:$0xff]
          %v1018 = vld [vmem:[%s2 + $0x30] sm:$0xff]
          %v1019 = vld [vmem:[%s2 + $0x38] sm:$0xff]
          %v1020 = vld [vmem:[%s2 + $0x40] sm:$0xff]
          %v1021 = vld [vmem:[%s2 + $0x48] sm:$0xff]
          %v1022 = vld [vmem:[%s2 + $0x50] sm:$0xff]
          %v1023 = vld [vmem:[%s2 + $0x58] sm:$0xff]
          %v1024 = vld [vmem:[%s2 + $0x60] sm:$0xff]
          %v1025 = vld [vmem:[%s2 + $0x68] sm:$0xff]
          %v1026 = vld [vmem:[%s2 + $0x70] sm:$0xff]
          %v1027 = vld [vmem:[%s2 + $0x78] sm:$0xff]
          %v1028 = vld [vmem:[%s2 + $0x80] sm:$0xff]
          %v1029 = vld [vmem:[%s2 + $0x88] sm:$0xff]
          %v1030 = vld [vmem:[%s2 + $0x90] sm:$0xff]
          %v1031 = vld [vmem:[%s2 + $0x98] sm:$0xff]
          %v1032 = vld [vmem:[%s2 + $0xa0] sm:$0xff]
          %v1033 = vld [vmem:[%s2 + $0xa8] sm:$0xff]
          %v1034 = vld [vmem:[%s2 + $0xb0] sm:$0xff]
          %v1035 = vld [vmem:[%s2 + $0xb8] sm:$0xff]
          %v1036 = vld [vmem:[%s2 + $0xc0] sm:$0xff]
          %v1037 = vld [vmem:[%s2 + $0xc8] sm:$0xff]
          %v1038 = vld [vmem:[%s2 + $0xd0] sm:$0xff]
          %v1039 = vld [vmem:[%s2 + $0xd8] sm:$0xff]
          %v1040 = vld [vmem:[%s2 + $0xe0] sm:$0xff]
          %v1041 = vld [vmem:[%s2 + $0xe8] sm:$0xff]
          %v1042 = vld [vmem:[%s2 + $0xf0] sm:$0xff]
          %v1043 = vld [vmem:[%s2 + $0xf8] sm:$0xff]
          %v1044 = vld [vmem:[%s2 + $0x100] sm:$0xff]
          %v1045 = vld [vmem:[%s2 + $0x108] sm:$0xff]
          %v1046 = vld [vmem:[%s2 + $0x110] sm:$0xff]
          %v1047 = vld [vmem:[%s2 + $0x118] sm:$0xff]
          %v1048 = vld [vmem:[%s2 + $0x120] sm:$0xff]
          %v1049 = vld [vmem:[%s2 + $0x128] sm:$0xff]
          %v1050 = vld [vmem:[%s2 + $0x130] sm:$0xff]
          %v1051 = vld [vmem:[%s2 + $0x138] sm:$0xff]
          %v1052 = vld [vmem:[%s2 + $0x140] sm:$0xff]
          %v1053 = vld [vmem:[%s2 + $0x148] sm:$0xff]
          %v1054 = vld [vmem:[%s2 + $0x150] sm:$0xff]
          %v1055 = vld [vmem:[%s2 + $0x158] sm:$0xff]
          %v1056 = vld [vmem:[%s2 + $0x160] sm:$0xff]
          %v1057 = vld [vmem:[%s2 + $0x168] sm:$0xff]
          %v1058 = vld [vmem:[%s2 + $0x170] sm:$0xff]
          %v1059 = vld [vmem:[%s2 + $0x178] sm:$0xff]
          %v1060 = vld [vmem:[%s2 + $0x180] sm:$0xff]
          %v1061 = vld [vmem:[%s2 + $0x188] sm:$0xff]
          %v1062 = vld [vmem:[%s2 + $0x190] sm:$0xff]
          %v1063 = vld [vmem:[%s2 + $0x198] sm:$0xff]
          %v1064 = vld [vmem:[%s2 + $0x1a0] sm:$0xff]
          %v1065 = vld [vmem:[%s2 + $0x1a8] sm:$0xff]
          %v1066 = vld [vmem:[%s2 + $0x1b0] sm:$0xff]
          %v1067 = vld [vmem:[%s2 + $0x1b8] sm:$0xff]
          %v1068 = vld [vmem:[%s2 + $0x1c0] sm:$0xff]
          %v1069 = vld [vmem:[%s2 + $0x1c8] sm:$0xff]
          %v1070 = vld [vmem:[%s2 + $0x1d0] sm:$0xff]
          %v1071 = vld [vmem:[%s2 + $0x1d8] sm:$0xff]
          %v1072 = vld [vmem:[%s2 + $0x1e0] sm:$0xff]
          %v1073 = vld [vmem:[%s2 + $0x1e8] sm:$0xff]
          %v1074 = vld [vmem:[%s2 + $0x1f0] sm:$0xff]
          %v1075 = vld [vmem:[%s2 + $0x1f8] sm:$0xff]
          %v1076 = vadd.f32 %v948, %v1012
          %v1077 = vadd.f32 %v949, %v1013
          %v1078 = vadd.f32 %v950, %v1014
          %v1079 = vadd.f32 %v951, %v1015
          %v1080 = vadd.f32 %v952, %v1016
          %v1081 = vadd.f32 %v953, %v1017
          %v1082 = vadd.f32 %v954, %v1018
          %v1083 = vadd.f32 %v955, %v1019
          %v1084 = vadd.f32 %v956, %v1020
          %v1085 = vadd.f32 %v957, %v1021
          %v1086 = vadd.f32 %v958, %v1022
          %v1087 = vadd.f32 %v959, %v1023
          %v1088 = vadd.f32 %v960, %v1024
          %v1089 = vadd.f32 %v961, %v1025
          %v1090 = vadd.f32 %v962, %v1026
          %v1091 = vadd.f32 %v963, %v1027
          %v1092 = vadd.f32 %v964, %v1028
          %v1093 = vadd.f32 %v965, %v1029
          %v1094 = vadd.f32 %v966, %v1030
          %v1095 = vadd.f32 %v967, %v1031
          %v1096 = vadd.f32 %v968, %v1032
          %v1097 = vadd.f32 %v969, %v1033
          %v1098 = vadd.f32 %v970, %v1034
          %v1099 = vadd.f32 %v971, %v1035
          %v1100 = vadd.f32 %v972, %v1036
          %v1101 = vadd.f32 %v973, %v1037
          %v1102 = vadd.f32 %v974, %v1038
          %v1103 = vadd.f32 %v975, %v1039
          %v1104 = vadd.f32 %v976, %v1040
          %v1105 = vadd.f32 %v977, %v1041
          %v1106 = vadd.f32 %v978, %v1042
          %v1107 = vadd.f32 %v979, %v1043
          %v1108 = vadd.f32 %v980, %v1044
          %v1109 = vadd.f32 %v981, %v1045
          %v1110 = vadd.f32 %v982, %v1046
          %v1111 = vadd.f32 %v983, %v1047
          %v1112 = vadd.f32 %v984, %v1048
          %v1113 = vadd.f32 %v985, %v1049
          %v1114 = vadd.f32 %v986, %v1050
          %v1115 = vadd.f32 %v987, %v1051
          %v1116 = vadd.f32 %v988, %v1052
          %v1117 = vadd.f32 %v989, %v1053
          %v1118 = vadd.f32 %v990, %v1054
          %v1119 = vadd.f32 %v991, %v1055
          %v1120 = vadd.f32 %v992, %v1056
          %v1121 = vadd.f32 %v993, %v1057
          %v1122 = vadd.f32 %v994, %v1058
          %v1123 = vadd.f32 %v995, %v1059
          %v1124 = vadd.f32 %v996, %v1060
          %v1125 = vadd.f32 %v997, %v1061
          %v1126 = vadd.f32 %v998, %v1062
          %v1127 = vadd.f32 %v999, %v1063
          %v1128 = vadd.f32 %v1000, %v1064
          %v1129 = vadd.f32 %v1001, %v1065
          %v1130 = vadd.f32 %v1002, %v1066
          %v1131 = vadd.f32 %v1003, %v1067
          %v1132 = vadd.f32 %v1004, %v1068
          %v1133 = vadd.f32 %v1005, %v1069
          %v1134 = vadd.f32 %v1006, %v1070
          %v1135 = vadd.f32 %v1007, %v1071
          %v1136 = vadd.f32 %v1008, %v1072
          %v1137 = vadd.f32 %v1009, %v1073
          %v1138 = vadd.f32 %v1010, %v1074
          %v1139 = vadd.f32 %v1011, %v1075
          %vm1140 = vcmp.gt.f32.partialorder %v1076, 0.0
          %vm1141 = vcmp.gt.f32.partialorder %v1077, 0.0
          %vm1142 = vcmp.gt.f32.partialorder %v1078, 0.0
          %vm1143 = vcmp.gt.f32.partialorder %v1079, 0.0
          %vm1144 = vcmp.gt.f32.partialorder %v1080, 0.0
          %vm1145 = vcmp.gt.f32.partialorder %v1081, 0.0
          %vm1146 = vcmp.gt.f32.partialorder %v1082, 0.0
          %vm1147 = vcmp.gt.f32.partialorder %v1083, 0.0
          %vm1148 = vcmp.gt.f32.partialorder %v1084, 0.0
          %vm1149 = vcmp.gt.f32.partialorder %v1085, 0.0
          %vm1150 = vcmp.gt.f32.partialorder %v1086, 0.0
          %vm1151 = vcmp.gt.f32.partialorder %v1087, 0.0
          %vm1152 = vcmp.gt.f32.partialorder %v1088, 0.0
          %vm1153 = vcmp.gt.f32.partialorder %v1089, 0.0
          %vm1154 = vcmp.gt.f32.partialorder %v1090, 0.0
          %vm1155 = vcmp.gt.f32.partialorder %v1091, 0.0
          %vm1156 = vcmp.gt.f32.partialorder %v1092, 0.0
          %vm1157 = vcmp.gt.f32.partialorder %v1093, 0.0
          %vm1158 = vcmp.gt.f32.partialorder %v1094, 0.0
          %vm1159 = vcmp.gt.f32.partialorder %v1095, 0.0
          %vm1160 = vcmp.gt.f32.partialorder %v1096, 0.0
          %vm1161 = vcmp.gt.f32.partialorder %v1097, 0.0
          %vm1162 = vcmp.gt.f32.partialorder %v1098, 0.0
          %vm1163 = vcmp.gt.f32.partialorder %v1099, 0.0
          %vm1164 = vcmp.gt.f32.partialorder %v1100, 0.0
          %vm1165 = vcmp.gt.f32.partialorder %v1101, 0.0
          %vm1166 = vcmp.gt.f32.partialorder %v1102, 0.0
          %vm1167 = vcmp.gt.f32.partialorder %v1103, 0.0
          %vm1168 = vcmp.gt.f32.partialorder %v1104, 0.0
          %vm1169 = vcmp.gt.f32.partialorder %v1105, 0.0
          %vm1170 = vcmp.gt.f32.partialorder %v1106, 0.0
          %vm1171 = vcmp.gt.f32.partialorder %v1107, 0.0
          %vm1172 = vcmp.gt.f32.partialorder %v1108, 0.0
          %vm1173 = vcmp.gt.f32.partialorder %v1109, 0.0
          %vm1174 = vcmp.gt.f32.partialorder %v1110, 0.0
          %vm1175 = vcmp.gt.f32.partialorder %v1111, 0.0
          %vm1176 = vcmp.gt.f32.partialorder %v1112, 0.0
          %vm1177 = vcmp.gt.f32.partialorder %v1113, 0.0
          %vm1178 = vcmp.gt.f32.partialorder %v1114, 0.0
          %vm1179 = vcmp.gt.f32.partialorder %v1115, 0.0
          %vm1180 = vcmp.gt.f32.partialorder %v1116, 0.0
          %vm1181 = vcmp.gt.f32.partialorder %v1117, 0.0
          %vm1182 = vcmp.gt.f32.partialorder %v1118, 0.0
          %vm1183 = vcmp.gt.f32.partialorder %v1119, 0.0
          %vm1184 = vcmp.gt.f32.partialorder %v1120, 0.0
          %vm1185 = vcmp.gt.f32.partialorder %v1121, 0.0
          %vm1186 = vcmp.gt.f32.partialorder %v1122, 0.0
          %vm1187 = vcmp.gt.f32.partialorder %v1123, 0.0
          %vm1188 = vcmp.gt.f32.partialorder %v1124, 0.0
          %vm1189 = vcmp.gt.f32.partialorder %v1125, 0.0
          %vm1190 = vcmp.gt.f32.partialorder %v1126, 0.0
          %vm1191 = vcmp.gt.f32.partialorder %v1127, 0.0
          %vm1192 = vcmp.gt.f32.partialorder %v1128, 0.0
          %vm1193 = vcmp.gt.f32.partialorder %v1129, 0.0
          %vm1194 = vcmp.gt.f32.partialorder %v1130, 0.0
          %vm1195 = vcmp.gt.f32.partialorder %v1131, 0.0
          %vm1196 = vcmp.gt.f32.partialorder %v1132, 0.0
          %vm1197 = vcmp.gt.f32.partialorder %v1133, 0.0
          %vm1198 = vcmp.gt.f32.partialorder %v1134, 0.0
          %vm1199 = vcmp.gt.f32.partialorder %v1135, 0.0
          %vm1200 = vcmp.gt.f32.partialorder %v1136, 0.0
          %vm1201 = vcmp.gt.f32.partialorder %v1137, 0.0
          %vm1202 = vcmp.gt.f32.partialorder %v1138, 0.0
          %vm1203 = vcmp.gt.f32.partialorder %v1139, 0.0
          %v1204 = vmul.f32 %v1076, 0.2
          %v1205 = vmul.f32 %v1077, 0.2
          %v1206 = vmul.f32 %v1078, 0.2
          %v1207 = vmul.f32 %v1079, 0.2
          %v1208 = vmul.f32 %v1080, 0.2
          %v1209 = vmul.f32 %v1081, 0.2
          %v1210 = vmul.f32 %v1082, 0.2
          %v1211 = vmul.f32 %v1083, 0.2
          %v1212 = vmul.f32 %v1084, 0.2
          %v1213 = vmul.f32 %v1085, 0.2
          %v1214 = vmul.f32 %v1086, 0.2
          %v1215 = vmul.f32 %v1087, 0.2
          %v1216 = vmul.f32 %v1088, 0.2
          %v1217 = vmul.f32 %v1089, 0.2
          %v1218 = vmul.f32 %v1090, 0.2
          %v1219 = vmul.f32 %v1091, 0.2
          %v1220 = vmul.f32 %v1092, 0.2
          %v1221 = vmul.f32 %v1093, 0.2
          %v1222 = vmul.f32 %v1094, 0.2
          %v1223 = vmul.f32 %v1095, 0.2
          %v1224 = vmul.f32 %v1096, 0.2
          %v1225 = vmul.f32 %v1097, 0.2
          %v1226 = vmul.f32 %v1098, 0.2
          %v1227 = vmul.f32 %v1099, 0.2
          %v1228 = vmul.f32 %v1100, 0.2
          %v1229 = vmul.f32 %v1101, 0.2
          %v1230 = vmul.f32 %v1102, 0.2
          %v1231 = vmul.f32 %v1103, 0.2
          %v1232 = vmul.f32 %v1104, 0.2
          %v1233 = vmul.f32 %v1105, 0.2
          %v1234 = vmul.f32 %v1106, 0.2
          %v1235 = vmul.f32 %v1107, 0.2
          %v1236 = vmul.f32 %v1108, 0.2
          %v1237 = vmul.f32 %v1109, 0.2
          %v1238 = vmul.f32 %v1110, 0.2
          %v1239 = vmul.f32 %v1111, 0.2
          %v1240 = vmul.f32 %v1112, 0.2
          %v1241 = vmul.f32 %v1113, 0.2
          %v1242 = vmul.f32 %v1114, 0.2
          %v1243 = vmul.f32 %v1115, 0.2
          %v1244 = vmul.f32 %v1116, 0.2
          %v1245 = vmul.f32 %v1117, 0.2
          %v1246 = vmul.f32 %v1118, 0.2
          %v1247 = vmul.f32 %v1119, 0.2
          %v1248 = vmul.f32 %v1120, 0.2
          %v1249 = vmul.f32 %v1121, 0.2
          %v1250 = vmul.f32 %v1122, 0.2
          %v1251 = vmul.f32 %v1123, 0.2
          %v1252 = vmul.f32 %v1124, 0.2
          %v1253 = vmul.f32 %v1125, 0.2
          %v1254 = vmul.f32 %v1126, 0.2
          %v1255 = vmul.f32 %v1127, 0.2
          %v1256 = vmul.f32 %v1128, 0.2
          %v1257 = vmul.f32 %v1129, 0.2
          %v1258 = vmul.f32 %v1130, 0.2
          %v1259 = vmul.f32 %v1131, 0.2
          %v1260 = vmul.f32 %v1132, 0.2
          %v1261 = vmul.f32 %v1133, 0.2
          %v1262 = vmul.f32 %v1134, 0.2
          %v1263 = vmul.f32 %v1135, 0.2
          %v1264 = vmul.f32 %v1136, 0.2
          %v1265 = vmul.f32 %v1137, 0.2
          %v1266 = vmul.f32 %v1138, 0.2
          %v1267 = vmul.f32 %v1139, 0.2
          %v1268 = vsel %vm1140, %v1076, %v1204
          %v1269 = vsel %vm1141, %v1077, %v1205
          %v1270 = vsel %vm1142, %v1078, %v1206
          %v1271 = vsel %vm1143, %v1079, %v1207
          %v1272 = vsel %vm1144, %v1080, %v1208
          %v1273 = vsel %vm1145, %v1081, %v1209
          %v1274 = vsel %vm1146, %v1082, %v1210
          %v1275 = vsel %vm1147, %v1083, %v1211
          %v1276 = vsel %vm1148, %v1084, %v1212
          %v1277 = vsel %vm1149, %v1085, %v1213
          %v1278 = vsel %vm1150, %v1086, %v1214
          %v1279 = vsel %vm1151, %v1087, %v1215
          %v1280 = vsel %vm1152, %v1088, %v1216
          %v1281 = vsel %vm1153, %v1089, %v1217
          %v1282 = vsel %vm1154, %v1090, %v1218
          %v1283 = vsel %vm1155, %v1091, %v1219
          %v1284 = vsel %vm1156, %v1092, %v1220
          %v1285 = vsel %vm1157, %v1093, %v1221
          %v1286 = vsel %vm1158, %v1094, %v1222
          %v1287 = vsel %vm1159, %v1095, %v1223
          %v1288 = vsel %vm1160, %v1096, %v1224
          %v1289 = vsel %vm1161, %v1097, %v1225
          %v1290 = vsel %vm1162, %v1098, %v1226
          %v1291 = vsel %vm1163, %v1099, %v1227
          %v1292 = vsel %vm1164, %v1100, %v1228
          %v1293 = vsel %vm1165, %v1101, %v1229
          %v1294 = vsel %vm1166, %v1102, %v1230
          %v1295 = vsel %vm1167, %v1103, %v1231
          %v1296 = vsel %vm1168, %v1104, %v1232
          %v1297 = vsel %vm1169, %v1105, %v1233
          %v1298 = vsel %vm1170, %v1106, %v1234
          %v1299 = vsel %vm1171, %v1107, %v1235
          %v1300 = vsel %vm1172, %v1108, %v1236
          %v1301 = vsel %vm1173, %v1109, %v1237
          %v1302 = vsel %vm1174, %v1110, %v1238
          %v1303 = vsel %vm1175, %v1111, %v1239
          %v1304 = vsel %vm1176, %v1112, %v1240
          %v1305 = vsel %vm1177, %v1113, %v1241
          %v1306 = vsel %vm1178, %v1114, %v1242
          %v1307 = vsel %vm1179, %v1115, %v1243
          %v1308 = vsel %vm1180, %v1116, %v1244
          %v1309 = vsel %vm1181, %v1117, %v1245
          %v1310 = vsel %vm1182, %v1118, %v1246
          %v1311 = vsel %vm1183, %v1119, %v1247
          %v1312 = vsel %vm1184, %v1120, %v1248
          %v1313 = vsel %vm1185, %v1121, %v1249
          %v1314 = vsel %vm1186, %v1122, %v1250
          %v1315 = vsel %vm1187, %v1123, %v1251
          %v1316 = vsel %vm1188, %v1124, %v1252
          %v1317 = vsel %vm1189, %v1125, %v1253
          %v1318 = vsel %vm1190, %v1126, %v1254
          %v1319 = vsel %vm1191, %v1127, %v1255
          %v1320 = vsel %vm1192, %v1128, %v1256
          %v1321 = vsel %vm1193, %v1129, %v1257
          %v1322 = vsel %vm1194, %v1130, %v1258
          %v1323 = vsel %vm1195, %v1131, %v1259
          %v1324 = vsel %vm1196, %v1132, %v1260
          %v1325 = vsel %vm1197, %v1133, %v1261
          %v1326 = vsel %vm1198, %v1134, %v1262
          %v1327 = vsel %vm1199, %v1135, %v1263
          %v1328 = vsel %vm1200, %v1136, %v1264
          %v1329 = vsel %vm1201, %v1137, %v1265
          %v1330 = vsel %vm1202, %v1138, %v1266
          %v1331 = vsel %vm1203, %v1139, %v1267
          %1332 = vst [vmem:[#allocation3] sm:$0xff] %v1268
          %1333 = vst [vmem:[#allocation3 + $0x8] sm:$0xff] %v1269
          %1334 = vst [vmem:[#allocation3 + $0x10] sm:$0xff] %v1270
          %1335 = vst [vmem:[#allocation3 + $0x18] sm:$0xff] %v1271
          %1336 = vst [vmem:[#allocation3 + $0x20] sm:$0xff] %v1272
          %1337 = vst [vmem:[#allocation3 + $0x28] sm:$0xff] %v1273
          %1338 = vst [vmem:[#allocation3 + $0x30] sm:$0xff] %v1274
          %1339 = vst [vmem:[#allocation3 + $0x38] sm:$0xff] %v1275
          %1340 = vst [vmem:[#allocation3 + $0x40] sm:$0xff] %v1276
          %1341 = vst [vmem:[#allocation3 + $0x48] sm:$0xff] %v1277
          %1342 = vst [vmem:[#allocation3 + $0x50] sm:$0xff] %v1278
          %1343 = vst [vmem:[#allocation3 + $0x58] sm:$0xff] %v1279
          %1344 = vst [vmem:[#allocation3 + $0x60] sm:$0xff] %v1280
          %1345 = vst [vmem:[#allocation3 + $0x68] sm:$0xff] %v1281
          %1346 = vst [vmem:[#allocation3 + $0x70] sm:$0xff] %v1282
          %1347 = vst [vmem:[#allocation3 + $0x78] sm:$0xff] %v1283
          %1348 = vst [vmem:[#allocation3 + $0x80] sm:$0xff] %v1284
          %1349 = vst [vmem:[#allocation3 + $0x88] sm:$0xff] %v1285
          %1350 = vst [vmem:[#allocation3 + $0x90] sm:$0xff] %v1286
          %1351 = vst [vmem:[#allocation3 + $0x98] sm:$0xff] %v1287
          %1352 = vst [vmem:[#allocation3 + $0xa0] sm:$0xff] %v1288
          %1353 = vst [vmem:[#allocation3 + $0xa8] sm:$0xff] %v1289
          %1354 = vst [vmem:[#allocation3 + $0xb0] sm:$0xff] %v1290
          %1355 = vst [vmem:[#allocation3 + $0xb8] sm:$0xff] %v1291
          %1356 = vst [vmem:[#allocation3 + $0xc0] sm:$0xff] %v1292
          %1357 = vst [vmem:[#allocation3 + $0xc8] sm:$0xff] %v1293
          %1358 = vst [vmem:[#allocation3 + $0xd0] sm:$0xff] %v1294
          %1359 = vst [vmem:[#allocation3 + $0xd8] sm:$0xff] %v1295
          %1360 = vst [vmem:[#allocation3 + $0xe0] sm:$0xff] %v1296
          %1361 = vst [vmem:[#allocation3 + $0xe8] sm:$0xff] %v1297
          %1362 = vst [vmem:[#allocation3 + $0xf0] sm:$0xff] %v1298
          %1363 = vst [vmem:[#allocation3 + $0xf8] sm:$0xff] %v1299
          %1364 = vst [vmem:[#allocation3 + $0x100] sm:$0xff] %v1300
          %1365 = vst [vmem:[#allocation3 + $0x108] sm:$0xff] %v1301
          %1366 = vst [vmem:[#allocation3 + $0x110] sm:$0xff] %v1302
          %1367 = vst [vmem:[#allocation3 + $0x118] sm:$0xff] %v1303
          %1368 = vst [vmem:[#allocation3 + $0x120] sm:$0xff] %v1304
          %1369 = vst [vmem:[#allocation3 + $0x128] sm:$0xff] %v1305
          %1370 = vst [vmem:[#allocation3 + $0x130] sm:$0xff] %v1306
          %1371 = vst [vmem:[#allocation3 + $0x138] sm:$0xff] %v1307
          %1372 = vst [vmem:[#allocation3 + $0x140] sm:$0xff] %v1308
          %1373 = vst [vmem:[#allocation3 + $0x148] sm:$0xff] %v1309
          %1374 = vst [vmem:[#allocation3 + $0x150] sm:$0xff] %v1310
          %1375 = vst [vmem:[#allocation3 + $0x158] sm:$0xff] %v1311
          %1376 = vst [vmem:[#allocation3 + $0x160] sm:$0xff] %v1312
          %1377 = vst [vmem:[#allocation3 + $0x168] sm:$0xff] %v1313
          %1378 = vst [vmem:[#allocation3 + $0x170] sm:$0xff] %v1314
          %1379 = vst [vmem:[#allocation3 + $0x178] sm:$0xff] %v1315
          %1380 = vst [vmem:[#allocation3 + $0x180] sm:$0xff] %v1316
          %1381 = vst [vmem:[#allocation3 + $0x188] sm:$0xff] %v1317
          %1382 = vst [vmem:[#allocation3 + $0x190] sm:$0xff] %v1318
          %1383 = vst [vmem:[#allocation3 + $0x198] sm:$0xff] %v1319
          %1384 = vst [vmem:[#allocation3 + $0x1a0] sm:$0xff] %v1320
          %1385 = vst [vmem:[#allocation3 + $0x1a8] sm:$0xff] %v1321
          %1386 = vst [vmem:[#allocation3 + $0x1b0] sm:$0xff] %v1322
          %1387 = vst [vmem:[#allocation3 + $0x1b8] sm:$0xff] %v1323
          %1388 = vst [vmem:[#allocation3 + $0x1c0] sm:$0xff] %v1324
          %1389 = vst [vmem:[#allocation3 + $0x1c8] sm:$0xff] %v1325
          %1390 = vst [vmem:[#allocation3 + $0x1d0] sm:$0xff] %v1326
          %1391 = vst [vmem:[#allocation3 + $0x1d8] sm:$0xff] %v1327
          %1392 = vst [vmem:[#allocation3 + $0x1e0] sm:$0xff] %v1328
          %1393 = vst [vmem:[#allocation3 + $0x1e8] sm:$0xff] %v1329
          %1394 = vst [vmem:[#allocation3 + $0x1f0] sm:$0xff] %v1330
          %1395 = vst [vmem:[#allocation3 + $0x1f8] sm:$0xff] %v1331
        $region44: #{setop_res_basic_block.1} parent=39 // pred_fallthru
          _
        // Predicated region
        $region45: #{setop_res_basic_block.1} parent=39 // pred_check
          %p1396 = pneg %p140
        $region46: #{setop_res_basic_block.1} parent=39 // pred_check_branch
          %1398 = sbr.rel (%p1396) target = $region48
        $region47: #{setop_res_basic_block.1} parent=39 // pred_region
          %1400 = vsyncadd [#allocation4], 0
          %s1401 = sshll.u32 [#allocation3], 4
          %s1402 = int_to_ptr.vmem [resolvable:$true] %s1401
          %s1403 = sshll.u32 %s5, 4
          %s1404 = int_to_ptr.hbm [resolvable:$true] %s1403
          %1409 = dma.vmem_to_hbm [thread:$0]  %s1402, 8192, %s1404, [#allocation4], 128, 128, 8
        $region48: #{setop_res_basic_block.1} parent=39 // pred_fallthru
          _
        // Predicated region
        $region49: #{setop_res_basic_block.1} parent=39 // pred_check
          %p1410 = pneg %p140
        $region50: #{setop_res_basic_block.1} parent=39 // pred_check_branch
          %1412 = sbr.rel (%p1410) target = $region52
        $region51: #{setop_res_basic_block.1} parent=39 // pred_region
          %1414 = dma.done [#allocation4], 8192
        $region52: #{setop_res_basic_block.1} parent=39 // pred_fallthru
          _
      $region40: #{setop_res_basic_block.1} parent=5 // pred_fallthru
        _
      %p1415 = scmp.le.s32.totalorder 2, %s12
      // Predicated region
      $region53: #{setop_res_basic_block.1} parent=5 // pred_check
        %p1416 = pneg %p1415
      $region54: #{setop_res_basic_block.1} parent=5 // pred_check_branch
        %1418 = sbr.rel (%p1416) target = $region56
      $region55: #{setop_res_basic_block.1} parent=5 // pred_region
        %s1419 = ssub.s32 %s12, 2
      $region56: #{setop_res_basic_block.1} parent=5 // pred_fallthru
        _
    $region6: #{setop_res_basic_block.1} parent=1 // loop_footer
      %s16 = sadd.s32 1, %s12
    $region7: #{setop_res_basic_block.1} parent=1 // loop_footer_branch
      %11 = sbr.rel target = $region3
    $region8: #{setop_res_basic_block.1} parent=1 // loop_exit
      _
    %1420 = vsyncpa [#allocation4], 1
    %s1421 = scalar_lea.sflag [#allocation4], 1
    %1422 = vsyncpa %s1421, 1

</llo_original>
